<compile_context>
chip_gen: v5e
topology: v5e:2x2
jax: 0.10.0
libtpu: 0.0.40
codegen_flags: <defaults>
</compile_context>

<pallas_src>
import functools

import jax
import jax.numpy as jnp
from jax.experimental import pallas as pl
from jax.experimental.pallas import tpu as pltpu


def _round_up(n, m):
    return ((n + m - 1) // m) * m


def ae_kernel(x_ref,
              w1, b1, w2, b2, w3, b3, wz, bz,
              wd1, bd1, wd2, bd2, wd3, bd3, wxb, bxb,
              slab_ref,
              *, offs, compute_dtype):
    """Fused AE forward: 8 Linear layers (ReLU on all but z / x_bar).

    All refs are zero-padded to lane-dense (multiple-of-128) feature dims.
    The five outputs are packed into `slab_ref` at 128-aligned static offsets.
    """
    def lin(a, w_ref, b_ref, relu):
        # MXU matmul with f32 accumulation; bias + ReLU epilogue in f32.
        y = jnp.dot(a, w_ref[...], preferred_element_type=jnp.float32)
        y = y + b_ref[...]
        if relu:
            y = jnp.maximum(y, 0.0)
        return y                                   # f32

    def nxt(y):
        return y.astype(compute_dtype)             # operand dtype for next matmul

    x = x_ref[...]
    h1 = lin(x,       w1,  b1,  True)
    h2 = lin(nxt(h1), w2,  b2,  True)
    h3 = lin(nxt(h2), w3,  b3,  True)
    z  = lin(nxt(h3), wz,  bz,  False)
    d1 = lin(nxt(z),  wd1, bd1, True)
    d2 = lin(nxt(d1), wd2, bd2, True)
    d3 = lin(nxt(d2), wd3, bd3, True)
    xb = lin(nxt(d3), wxb, bxb, False)

    # Lane-dense packed stores (static 128-aligned offsets, widths % 128 == 0).
    for val, (start, width) in zip((xb, h1, h2, h3, z), offs):
        slab_ref[:, start:start + width] = val.astype(slab_ref.dtype)


def ae_forward(x, params, *, tb=256, compute_dtype=jnp.float32):
    """AE forward.

    x:      (B, n_input) float32
    params: list of 8 (W, b) pairs; W is (in, out) (pre-transposed vs torch),
            b is (1, out).
    Returns (x_bar, enc_h1, enc_h2, enc_h3, z), all float32.
    """
    B, n_input = x.shape
    dims_out = [w.shape[1] for (w, _) in params]
    n_enc_1, n_enc_2, n_enc_3, n_z, n_dec_1, n_dec_2, n_dec_3, n_in_out = dims_out
    assert n_in_out == n_input

    # ---- zero-pad every feature dim to a multiple of 128 (lane-dense) ------
    def pad_cols(a, to):
        return jnp.pad(a, ((0, 0), (0, to - a.shape[1])))

    padded_params = []
    for (w, b) in params:
        kp = _round_up(w.shape[0], 128)
        np_ = _round_up(w.shape[1], 128)
        wp = jnp.pad(w, ((0, kp - w.shape[0]), (0, np_ - w.shape[1])))
        bp = pad_cols(b, np_)
        padded_params.append((wp.astype(compute_dtype), bp.astype(jnp.float32)))

    n_input_p = _round_up(n_input, 128)
    x_p = pad_cols(x, n_input_p).astype(compute_dtype)

    # ---- packed output slab layout: [x_bar | h1 | h2 | h3 | z] -------------
    real_widths = (n_input, n_enc_1, n_enc_2, n_enc_3, n_z)
    pad_widths = tuple(_round_up(w, 128) for w in real_widths)
    starts, acc = [], 0
    for w in pad_widths:
        starts.append(acc)
        acc += w
    slab_w = acc
    offs = tuple(zip(starts, pad_widths))

    # ---- grid / tiling ------------------------------------------------------
    tb = min(tb, _round_up(B, 8))        # keep tb a multiple of 8, not > data
    grid = (pl.cdiv(B, tb),)

    x_spec = pl.BlockSpec((tb, n_input_p), lambda i: (i, 0))
    wb_specs = []
    for (wp, bp) in padded_params:
        wb_specs.append(pl.BlockSpec(wp.shape, lambda i: (0, 0)))
        wb_specs.append(pl.BlockSpec(bp.shape, lambda i: (0, 0)))
    slab_spec = pl.BlockSpec((tb, slab_w), lambda i: (i, 0))

    flat_params = [a for wb in padded_params for a in wb]

    # ---- cost hint for the XLA scheduler ------------------------------------
    itemsize = jnp.dtype(compute_dtype).itemsize
    flops = 2 * B * sum(wp.shape[0] * wp.shape[1] for (wp, _) in padded_params)
    bytes_accessed = (
        x_p.size * itemsize
        + sum(wp.size * itemsize + bp.size * 4 for (wp, bp) in padded_params)
        + B * slab_w * 4)
    cost = pl.CostEstimate(flops=flops, transcendentals=0,
                           bytes_accessed=bytes_accessed)

    slab = pl.pallas_call(
        functools.partial(ae_kernel, offs=offs, compute_dtype=compute_dtype),
        out_shape=jax.ShapeDtypeStruct((B, slab_w), jnp.float32),
        grid_spec=pltpu.PrefetchScalarGridSpec(
            num_scalar_prefetch=0,
            grid=grid,
            in_specs=[x_spec] + wb_specs,
            out_specs=slab_spec,
        ),
        compiler_params=pltpu.CompilerParams(
            dimension_semantics=("parallel",)),
        cost_estimate=cost,
    )(x_p, *flat_params)

    # Slice the packed slab back into the five real-width outputs.
    return tuple(slab[:, s:s + rw]
                 for (s, _), rw in zip(offs, real_widths))


def init_params(key, n_enc_1, n_enc_2, n_enc_3, n_dec_1, n_dec_2, n_dec_3,
                n_input, n_z):
    """Deterministic synthetic init (PyTorch-Linear-like uniform fan-in)."""
    layer_dims = [
        (n_input, n_enc_1), (n_enc_1, n_enc_2), (n_enc_2, n_enc_3),
        (n_enc_3, n_z),
        (n_z, n_dec_1), (n_dec_1, n_dec_2), (n_dec_2, n_dec_3),
        (n_dec_3, n_input),
    ]
    params = []
    for (fan_in, fan_out) in layer_dims:
        key, kw, kb = jax.random.split(key, 3)
        bound = 1.0 / jnp.sqrt(fan_in)
        w = jax.random.uniform(kw, (fan_in, fan_out), jnp.float32, -bound, bound)
        b = jax.random.uniform(kb, (1, fan_out), jnp.float32, -bound, bound)
        params.append((w, b))
    return params


def ae_reference(x, params):
    def lin(a, w, b, relu):
        y = a @ w + b
        return jnp.maximum(y, 0.0) if relu else y
    (w1, b1), (w2, b2), (w3, b3), (wz, bz), \
        (wd1, bd1), (wd2, bd2), (wd3, bd3), (wxb, bxb) = params
    h1 = lin(x,  w1,  b1,  True)
    h2 = lin(h1, w2,  b2,  True)
    h3 = lin(h2, w3,  b3,  True)
    z  = lin(h3, wz,  bz,  False)
    d1 = lin(z,  wd1, bd1, True)
    d2 = lin(d1, wd2, bd2, True)
    d3 = lin(d2, wd3, bd3, True)
    xb = lin(d3, wxb, bxb, False)
    return xb, h1, h2, h3, z


if __name__ == "__main__":
    # Small AE config: n_input=32, enc 64->32->16, z=8, dec 16->32->64.
    n_input, n_z = 32, 8
    n_enc_1, n_enc_2, n_enc_3 = 64, 32, 16
    n_dec_1, n_dec_2, n_dec_3 = 16, 32, 64
    batch = 512          # 2 grid steps at tb=256 -> both v7x TCs get work

    key = jax.random.PRNGKey(0)
    key, kx = jax.random.split(key)
    x = jax.random.normal(kx, (batch, n_input), jnp.float32)
    params = init_params(key, n_enc_1, n_enc_2, n_enc_3,
                         n_dec_1, n_dec_2, n_dec_3, n_input, n_z)

    refs = ae_reference(x, params)

    # f32 path: must match the reference tightly.
    outs = jax.block_until_ready(ae_forward(x, params, tb=256))
    for o, r in zip(outs, refs):
        assert o.shape == r.shape and o.dtype == r.dtype
        assert jnp.allclose(o, r, atol=1e-4, rtol=1e-4), "f32 mismatch vs reference"

    # bf16 MXU path (v6e/v7x fast path; f32 accumulate + epilogue): loose check.
    outs_bf16 = jax.block_until_ready(
        ae_forward(x, params, tb=256, compute_dtype=jnp.bfloat16))
    for o, r in zip(outs_bf16, refs):
        assert o.shape == r.shape and o.dtype == r.dtype
        assert jnp.allclose(o, r, atol=1e-1, rtol=1e-1), "bf16 mismatch vs reference"

    print("KERNEL_OK")
</pallas_src>

<mosaic_0001>
module attributes {stable_mosaic.version = 11 : i64} {
  func.func @ae_kernel(%arg0: i32, %arg1: memref<256x128xf32, #tpu.memory_space<vmem>>, %arg2: memref<128x128xf32, #tpu.memory_space<vmem>>, %arg3: memref<1x128xf32, #tpu.memory_space<vmem>>, %arg4: memref<128x128xf32, #tpu.memory_space<vmem>>, %arg5: memref<1x128xf32, #tpu.memory_space<vmem>>, %arg6: memref<128x128xf32, #tpu.memory_space<vmem>>, %arg7: memref<1x128xf32, #tpu.memory_space<vmem>>, %arg8: memref<128x128xf32, #tpu.memory_space<vmem>>, %arg9: memref<1x128xf32, #tpu.memory_space<vmem>>, %arg10: memref<128x128xf32, #tpu.memory_space<vmem>>, %arg11: memref<1x128xf32, #tpu.memory_space<vmem>>, %arg12: memref<128x128xf32, #tpu.memory_space<vmem>>, %arg13: memref<1x128xf32, #tpu.memory_space<vmem>>, %arg14: memref<128x128xf32, #tpu.memory_space<vmem>>, %arg15: memref<1x128xf32, #tpu.memory_space<vmem>>, %arg16: memref<128x128xf32, #tpu.memory_space<vmem>>, %arg17: memref<1x128xf32, #tpu.memory_space<vmem>>, %arg18: memref<256x640xf32, #tpu.memory_space<vmem>>) attributes {dimension_semantics = [#tpu.dimension_semantics<parallel>], iteration_bounds = array<i64: 2>, scalar_prefetch = 0 : i64, scratch_operands = 0 : i64, tpu.core_type = #tpu.core_type<tc>, window_params = [{transform_indices = @transform_0, window_bounds = array<i64: 256, 128>}, {pipeline_mode = #tpu.pipeline_mode<synchronous>, transform_indices = @transform_1, window_bounds = array<i64: 128, 128>}, {pipeline_mode = #tpu.pipeline_mode<synchronous>, transform_indices = @transform_2, window_bounds = array<i64: 1, 128>}, {pipeline_mode = #tpu.pipeline_mode<synchronous>, transform_indices = @transform_3, window_bounds = array<i64: 128, 128>}, {pipeline_mode = #tpu.pipeline_mode<synchronous>, transform_indices = @transform_4, window_bounds = array<i64: 1, 128>}, {pipeline_mode = #tpu.pipeline_mode<synchronous>, transform_indices = @transform_5, window_bounds = array<i64: 128, 128>}, {pipeline_mode = #tpu.pipeline_mode<synchronous>, transform_indices = @transform_6, window_bounds = array<i64: 1, 128>}, {pipeline_mode = #tpu.pipeline_mode<synchronous>, transform_indices = @transform_7, window_bounds = array<i64: 128, 128>}, {pipeline_mode = #tpu.pipeline_mode<synchronous>, transform_indices = @transform_8, window_bounds = array<i64: 1, 128>}, {pipeline_mode = #tpu.pipeline_mode<synchronous>, transform_indices = @transform_9, window_bounds = array<i64: 128, 128>}, {pipeline_mode = #tpu.pipeline_mode<synchronous>, transform_indices = @transform_10, window_bounds = array<i64: 1, 128>}, {pipeline_mode = #tpu.pipeline_mode<synchronous>, transform_indices = @transform_11, window_bounds = array<i64: 128, 128>}, {pipeline_mode = #tpu.pipeline_mode<synchronous>, transform_indices = @transform_12, window_bounds = array<i64: 1, 128>}, {pipeline_mode = #tpu.pipeline_mode<synchronous>, transform_indices = @transform_13, window_bounds = array<i64: 128, 128>}, {pipeline_mode = #tpu.pipeline_mode<synchronous>, transform_indices = @transform_14, window_bounds = array<i64: 1, 128>}, {pipeline_mode = #tpu.pipeline_mode<synchronous>, transform_indices = @transform_15, window_bounds = array<i64: 128, 128>}, {pipeline_mode = #tpu.pipeline_mode<synchronous>, transform_indices = @transform_16, window_bounds = array<i64: 1, 128>}, {transform_indices = @transform_17, window_bounds = array<i64: 256, 640>}]} {
    %c0 = arith.constant 0 : index
    %c0_0 = arith.constant 0 : index
    %0 = vector.load %arg1[%c0, %c0_0] : memref<256x128xf32, #tpu.memory_space<vmem>>, vector<256x128xf32>
    %c0_1 = arith.constant 0 : index
    %c0_2 = arith.constant 0 : index
    %1 = vector.load %arg2[%c0_1, %c0_2] : memref<128x128xf32, #tpu.memory_space<vmem>>, vector<128x128xf32>
    %cst = arith.constant dense<0.000000e+00> : vector<256x128xf32>
    %2 = tpu.matmul %0, %1, %cst {dimension_numbers = #tpu.dot_dimension_numbers<[1], [0], [0], [1], [0, 0, 1, 1], [], []>} : vector<256x128xf32>, vector<128x128xf32>, vector<256x128xf32> -> vector<256x128xf32>
    %c0_3 = arith.constant 0 : index
    %c0_4 = arith.constant 0 : index
    %3 = vector.load %arg3[%c0_3, %c0_4] : memref<1x128xf32, #tpu.memory_space<vmem>>, vector<1x128xf32>
    %4 = vector.broadcast %3 : vector<1x128xf32> to vector<256x128xf32>
    %5 = arith.addf %2, %4 : vector<256x128xf32>
    %cst_5 = arith.constant 0.000000e+00 : f32
    %6 = vector.broadcast %cst_5 : f32 to vector<256x128xf32>
    %7 = arith.maximumf %5, %6 : vector<256x128xf32>
    %c0_6 = arith.constant 0 : index
    %c0_7 = arith.constant 0 : index
    %8 = vector.load %arg4[%c0_6, %c0_7] : memref<128x128xf32, #tpu.memory_space<vmem>>, vector<128x128xf32>
    %cst_8 = arith.constant dense<0.000000e+00> : vector<256x128xf32>
    %9 = tpu.matmul %7, %8, %cst_8 {dimension_numbers = #tpu.dot_dimension_numbers<[1], [0], [0], [1], [0, 0, 1, 1], [], []>} : vector<256x128xf32>, vector<128x128xf32>, vector<256x128xf32> -> vector<256x128xf32>
    %c0_9 = arith.constant 0 : index
    %c0_10 = arith.constant 0 : index
    %10 = vector.load %arg5[%c0_9, %c0_10] : memref<1x128xf32, #tpu.memory_space<vmem>>, vector<1x128xf32>
    %11 = vector.broadcast %10 : vector<1x128xf32> to vector<256x128xf32>
    %12 = arith.addf %9, %11 : vector<256x128xf32>
    %cst_11 = arith.constant 0.000000e+00 : f32
    %13 = vector.broadcast %cst_11 : f32 to vector<256x128xf32>
    %14 = arith.maximumf %12, %13 : vector<256x128xf32>
    %c0_12 = arith.constant 0 : index
    %c0_13 = arith.constant 0 : index
    %15 = vector.load %arg6[%c0_12, %c0_13] : memref<128x128xf32, #tpu.memory_space<vmem>>, vector<128x128xf32>
    %cst_14 = arith.constant dense<0.000000e+00> : vector<256x128xf32>
    %16 = tpu.matmul %14, %15, %cst_14 {dimension_numbers = #tpu.dot_dimension_numbers<[1], [0], [0], [1], [0, 0, 1, 1], [], []>} : vector<256x128xf32>, vector<128x128xf32>, vector<256x128xf32> -> vector<256x128xf32>
    %c0_15 = arith.constant 0 : index
    %c0_16 = arith.constant 0 : index
    %17 = vector.load %arg7[%c0_15, %c0_16] : memref<1x128xf32, #tpu.memory_space<vmem>>, vector<1x128xf32>
    %18 = vector.broadcast %17 : vector<1x128xf32> to vector<256x128xf32>
    %19 = arith.addf %16, %18 : vector<256x128xf32>
    %cst_17 = arith.constant 0.000000e+00 : f32
    %20 = vector.broadcast %cst_17 : f32 to vector<256x128xf32>
    %21 = arith.maximumf %19, %20 : vector<256x128xf32>
    %c0_18 = arith.constant 0 : index
    %c0_19 = arith.constant 0 : index
    %22 = vector.load %arg8[%c0_18, %c0_19] : memref<128x128xf32, #tpu.memory_space<vmem>>, vector<128x128xf32>
    %cst_20 = arith.constant dense<0.000000e+00> : vector<256x128xf32>
    %23 = tpu.matmul %21, %22, %cst_20 {dimension_numbers = #tpu.dot_dimension_numbers<[1], [0], [0], [1], [0, 0, 1, 1], [], []>} : vector<256x128xf32>, vector<128x128xf32>, vector<256x128xf32> -> vector<256x128xf32>
    %c0_21 = arith.constant 0 : index
    %c0_22 = arith.constant 0 : index
    %24 = vector.load %arg9[%c0_21, %c0_22] : memref<1x128xf32, #tpu.memory_space<vmem>>, vector<1x128xf32>
    %25 = vector.broadcast %24 : vector<1x128xf32> to vector<256x128xf32>
    %26 = arith.addf %23, %25 : vector<256x128xf32>
    %c0_23 = arith.constant 0 : index
    %c0_24 = arith.constant 0 : index
    %27 = vector.load %arg10[%c0_23, %c0_24] : memref<128x128xf32, #tpu.memory_space<vmem>>, vector<128x128xf32>
    %cst_25 = arith.constant dense<0.000000e+00> : vector<256x128xf32>
    %28 = tpu.matmul %26, %27, %cst_25 {dimension_numbers = #tpu.dot_dimension_numbers<[1], [0], [0], [1], [0, 0, 1, 1], [], []>} : vector<256x128xf32>, vector<128x128xf32>, vector<256x128xf32> -> vector<256x128xf32>
    %c0_26 = arith.constant 0 : index
    %c0_27 = arith.constant 0 : index
    %29 = vector.load %arg11[%c0_26, %c0_27] : memref<1x128xf32, #tpu.memory_space<vmem>>, vector<1x128xf32>
    %30 = vector.broadcast %29 : vector<1x128xf32> to vector<256x128xf32>
    %31 = arith.addf %28, %30 : vector<256x128xf32>
    %cst_28 = arith.constant 0.000000e+00 : f32
    %32 = vector.broadcast %cst_28 : f32 to vector<256x128xf32>
    %33 = arith.maximumf %31, %32 : vector<256x128xf32>
    %c0_29 = arith.constant 0 : index
    %c0_30 = arith.constant 0 : index
    %34 = vector.load %arg12[%c0_29, %c0_30] : memref<128x128xf32, #tpu.memory_space<vmem>>, vector<128x128xf32>
    %cst_31 = arith.constant dense<0.000000e+00> : vector<256x128xf32>
    %35 = tpu.matmul %33, %34, %cst_31 {dimension_numbers = #tpu.dot_dimension_numbers<[1], [0], [0], [1], [0, 0, 1, 1], [], []>} : vector<256x128xf32>, vector<128x128xf32>, vector<256x128xf32> -> vector<256x128xf32>
    %c0_32 = arith.constant 0 : index
    %c0_33 = arith.constant 0 : index
    %36 = vector.load %arg13[%c0_32, %c0_33] : memref<1x128xf32, #tpu.memory_space<vmem>>, vector<1x128xf32>
    %37 = vector.broadcast %36 : vector<1x128xf32> to vector<256x128xf32>
    %38 = arith.addf %35, %37 : vector<256x128xf32>
    %cst_34 = arith.constant 0.000000e+00 : f32
    %39 = vector.broadcast %cst_34 : f32 to vector<256x128xf32>
    %40 = arith.maximumf %38, %39 : vector<256x128xf32>
    %c0_35 = arith.constant 0 : index
    %c0_36 = arith.constant 0 : index
    %41 = vector.load %arg14[%c0_35, %c0_36] : memref<128x128xf32, #tpu.memory_space<vmem>>, vector<128x128xf32>
    %cst_37 = arith.constant dense<0.000000e+00> : vector<256x128xf32>
    %42 = tpu.matmul %40, %41, %cst_37 {dimension_numbers = #tpu.dot_dimension_numbers<[1], [0], [0], [1], [0, 0, 1, 1], [], []>} : vector<256x128xf32>, vector<128x128xf32>, vector<256x128xf32> -> vector<256x128xf32>
    %c0_38 = arith.constant 0 : index
    %c0_39 = arith.constant 0 : index
    %43 = vector.load %arg15[%c0_38, %c0_39] : memref<1x128xf32, #tpu.memory_space<vmem>>, vector<1x128xf32>
    %44 = vector.broadcast %43 : vector<1x128xf32> to vector<256x128xf32>
    %45 = arith.addf %42, %44 : vector<256x128xf32>
    %cst_40 = arith.constant 0.000000e+00 : f32
    %46 = vector.broadcast %cst_40 : f32 to vector<256x128xf32>
    %47 = arith.maximumf %45, %46 : vector<256x128xf32>
    %c0_41 = arith.constant 0 : index
    %c0_42 = arith.constant 0 : index
    %48 = vector.load %arg16[%c0_41, %c0_42] : memref<128x128xf32, #tpu.memory_space<vmem>>, vector<128x128xf32>
    %cst_43 = arith.constant dense<0.000000e+00> : vector<256x128xf32>
    %49 = tpu.matmul %47, %48, %cst_43 {dimension_numbers = #tpu.dot_dimension_numbers<[1], [0], [0], [1], [0, 0, 1, 1], [], []>} : vector<256x128xf32>, vector<128x128xf32>, vector<256x128xf32> -> vector<256x128xf32>
    %c0_44 = arith.constant 0 : index
    %c0_45 = arith.constant 0 : index
    %50 = vector.load %arg17[%c0_44, %c0_45] : memref<1x128xf32, #tpu.memory_space<vmem>>, vector<1x128xf32>
    %51 = vector.broadcast %50 : vector<1x128xf32> to vector<256x128xf32>
    %52 = arith.addf %49, %51 : vector<256x128xf32>
    %c0_46 = arith.constant 0 : index
    %c0_47 = arith.constant 0 : index
    %53 = vector.load %arg18[%c0_46, %c0_47] : memref<256x640xf32, #tpu.memory_space<vmem>>, vector<256x128xf32>
    tpu.vector_store %arg18[%c0_46, %c0_47], %52 {strides = array<i32>} : memref<256x640xf32, #tpu.memory_space<vmem>>, vector<256x128xf32>,
    %c0_48 = arith.constant 0 : index
    %c128 = arith.constant 128 : index
    %54 = vector.load %arg18[%c0_48, %c128] : memref<256x640xf32, #tpu.memory_space<vmem>>, vector<256x128xf32>
    tpu.vector_store %arg18[%c0_48, %c128], %7 {strides = array<i32>} : memref<256x640xf32, #tpu.memory_space<vmem>>, vector<256x128xf32>,
    %c0_49 = arith.constant 0 : index
    %c256 = arith.constant 256 : index
    %55 = vector.load %arg18[%c0_49, %c256] : memref<256x640xf32, #tpu.memory_space<vmem>>, vector<256x128xf32>
    tpu.vector_store %arg18[%c0_49, %c256], %14 {strides = array<i32>} : memref<256x640xf32, #tpu.memory_space<vmem>>, vector<256x128xf32>,
    %c0_50 = arith.constant 0 : index
    %c384 = arith.constant 384 : index
    %56 = vector.load %arg18[%c0_50, %c384] : memref<256x640xf32, #tpu.memory_space<vmem>>, vector<256x128xf32>
    tpu.vector_store %arg18[%c0_50, %c384], %21 {strides = array<i32>} : memref<256x640xf32, #tpu.memory_space<vmem>>, vector<256x128xf32>,
    %c0_51 = arith.constant 0 : index
    %c512 = arith.constant 512 : index
    %57 = vector.load %arg18[%c0_51, %c512] : memref<256x640xf32, #tpu.memory_space<vmem>>, vector<256x128xf32>
    tpu.vector_store %arg18[%c0_51, %c512], %26 {strides = array<i32>} : memref<256x640xf32, #tpu.memory_space<vmem>>, vector<256x128xf32>,
    return
  }
  func.func @transform_0(%arg0: i32) -> (i32, i32) {
    %c0_i32 = arith.constant 0 : i32
    %c0_i32_0 = arith.constant 0 : i32
    return %arg0, %c0_i32 : i32, i32
  }
  func.func @transform_1(%arg0: i32) -> (i32, i32) {
    %c0_i32 = arith.constant 0 : i32
    %c0_i32_0 = arith.constant 0 : i32
    %c0_i32_1 = arith.constant 0 : i32
    return %c0_i32, %c0_i32_0 : i32, i32
  }
  func.func @transform_2(%arg0: i32) -> (i32, i32) {
    %c0_i32 = arith.constant 0 : i32
    %c0_i32_0 = arith.constant 0 : i32
    %c0_i32_1 = arith.constant 0 : i32
    return %c0_i32, %c0_i32_0 : i32, i32
  }
  func.func @transform_3(%arg0: i32) -> (i32, i32) {
    %c0_i32 = arith.constant 0 : i32
    %c0_i32_0 = arith.constant 0 : i32
    %c0_i32_1 = arith.constant 0 : i32
    return %c0_i32, %c0_i32_0 : i32, i32
  }
  func.func @transform_4(%arg0: i32) -> (i32, i32) {
    %c0_i32 = arith.constant 0 : i32
    %c0_i32_0 = arith.constant 0 : i32
    %c0_i32_1 = arith.constant 0 : i32
    return %c0_i32, %c0_i32_0 : i32, i32
  }
  func.func @transform_5(%arg0: i32) -> (i32, i32) {
    %c0_i32 = arith.constant 0 : i32
    %c0_i32_0 = arith.constant 0 : i32
    %c0_i32_1 = arith.constant 0 : i32
    return %c0_i32, %c0_i32_0 : i32, i32
  }
  func.func @transform_6(%arg0: i32) -> (i32, i32) {
    %c0_i32 = arith.constant 0 : i32
    %c0_i32_0 = arith.constant 0 : i32
    %c0_i32_1 = arith.constant 0 : i32
    return %c0_i32, %c0_i32_0 : i32, i32
  }
  func.func @transform_7(%arg0: i32) -> (i32, i32) {
    %c0_i32 = arith.constant 0 : i32
    %c0_i32_0 = arith.constant 0 : i32
    %c0_i32_1 = arith.constant 0 : i32
    return %c0_i32, %c0_i32_0 : i32, i32
  }
  func.func @transform_8(%arg0: i32) -> (i32, i32) {
    %c0_i32 = arith.constant 0 : i32
    %c0_i32_0 = arith.constant 0 : i32
    %c0_i32_1 = arith.constant 0 : i32
    return %c0_i32, %c0_i32_0 : i32, i32
  }
  func.func @transform_9(%arg0: i32) -> (i32, i32) {
    %c0_i32 = arith.constant 0 : i32
    %c0_i32_0 = arith.constant 0 : i32
    %c0_i32_1 = arith.constant 0 : i32
    return %c0_i32, %c0_i32_0 : i32, i32
  }
  func.func @transform_10(%arg0: i32) -> (i32, i32) {
    %c0_i32 = arith.constant 0 : i32
    %c0_i32_0 = arith.constant 0 : i32
    %c0_i32_1 = arith.constant 0 : i32
    return %c0_i32, %c0_i32_0 : i32, i32
  }
  func.func @transform_11(%arg0: i32) -> (i32, i32) {
    %c0_i32 = arith.constant 0 : i32
    %c0_i32_0 = arith.constant 0 : i32
    %c0_i32_1 = arith.constant 0 : i32
    return %c0_i32, %c0_i32_0 : i32, i32
  }
  func.func @transform_12(%arg0: i32) -> (i32, i32) {
    %c0_i32 = arith.constant 0 : i32
    %c0_i32_0 = arith.constant 0 : i32
    %c0_i32_1 = arith.constant 0 : i32
    return %c0_i32, %c0_i32_0 : i32, i32
  }
  func.func @transform_13(%arg0: i32) -> (i32, i32) {
    %c0_i32 = arith.constant 0 : i32
    %c0_i32_0 = arith.constant 0 : i32
    %c0_i32_1 = arith.constant 0 : i32
    return %c0_i32, %c0_i32_0 : i32, i32
  }
  func.func @transform_14(%arg0: i32) -> (i32, i32) {
    %c0_i32 = arith.constant 0 : i32
    %c0_i32_0 = arith.constant 0 : i32
    %c0_i32_1 = arith.constant 0 : i32
    return %c0_i32, %c0_i32_0 : i32, i32
  }
  func.func @transform_15(%arg0: i32) -> (i32, i32) {
    %c0_i32 = arith.constant 0 : i32
    %c0_i32_0 = arith.constant 0 : i32
    %c0_i32_1 = arith.constant 0 : i32
    return %c0_i32, %c0_i32_0 : i32, i32
  }
  func.func @transform_16(%arg0: i32) -> (i32, i32) {
    %c0_i32 = arith.constant 0 : i32
    %c0_i32_0 = arith.constant 0 : i32
    %c0_i32_1 = arith.constant 0 : i32
    return %c0_i32, %c0_i32_0 : i32, i32
  }
  func.func @transform_17(%arg0: i32) -> (i32, i32) {
    %c0_i32 = arith.constant 0 : i32
    %c0_i32_0 = arith.constant 0 : i32
    return %arg0, %c0_i32 : i32, i32
  }
}

</mosaic_0001>

<llo_original>
// kernel: tpu_custom_call.1
$region0: #{tpu_custom_call.1}
  #allocation0 [shape = 'u32[]', space=smem, size = 0x4, offset = 0x4, fixed_abs, tag = 'smem constant byte address 0x4 - core index']
  #allocation1 [shape = 'u32[72,128]{1,0:T(1,128)}', space=vmem, size = 0x9000, scoped, tag = 'internal scratch']
  %s0 = inlined_call_operand.hbm [shape: f32[512,128], index: 0, kind: input, shape index: {}]
  %s1 = inlined_call_operand.hbm [shape: f32[128,128], index: 1, kind: input, shape index: {}]
  %s2 = inlined_call_operand.hbm [shape: f32[1,128], index: 2, kind: input, shape index: {}]
  %s3 = inlined_call_operand.hbm [shape: f32[128,128], index: 3, kind: input, shape index: {}]
  %s4 = inlined_call_operand.hbm [shape: f32[1,128], index: 4, kind: input, shape index: {}]
  %s5 = inlined_call_operand.hbm [shape: f32[128,128], index: 5, kind: input, shape index: {}]
  %s6 = inlined_call_operand.hbm [shape: f32[1,128], index: 6, kind: input, shape index: {}]
  %s7 = inlined_call_operand.hbm [shape: f32[128,128], index: 7, kind: input, shape index: {}]
  %s8 = inlined_call_operand.hbm [shape: f32[1,128], index: 8, kind: input, shape index: {}]
  %s9 = inlined_call_operand.hbm [shape: f32[128,128], index: 9, kind: input, shape index: {}]
  %s10 = inlined_call_operand.hbm [shape: f32[1,128], index: 10, kind: input, shape index: {}]
  %s11 = inlined_call_operand.hbm [shape: f32[128,128], index: 11, kind: input, shape index: {}]
  %s12 = inlined_call_operand.hbm [shape: f32[1,128], index: 12, kind: input, shape index: {}]
  %s13 = inlined_call_operand.hbm [shape: f32[128,128], index: 13, kind: input, shape index: {}]
  %s14 = inlined_call_operand.hbm [shape: f32[1,128], index: 14, kind: input, shape index: {}]
  %s15 = inlined_call_operand.hbm [shape: f32[128,128], index: 15, kind: input, shape index: {}]
  %s16 = inlined_call_operand.hbm [shape: f32[1,128], index: 16, kind: input, shape index: {}]
  %s17 = inlined_call_operand.hbm [shape: f32[512,640], index: 17, kind: output, shape index: {}]
  %s18 = sld [smem:[#allocation0]]
  $region169: #{tpu_custom_call.1} parent=0
    _
  %s20 = ssub.s32 1, %s18
  %s21 = scalar_select 0, %s20, %s18
  $region1: #{tpu_custom_call.1} parent=0
    #allocation2 [shape = 'u8[262144]{0}', space=vmem, size = 0x40000, scoped, tag = 'input window, operand 0']
    #allocation3 [shape = 's32[2]{0}', space=sflag, size = 0x8, scoped, tag = 'scoped memory for tpu_custom_call.1']
    #allocation4 [shape = 's32[2]{0}', space=sflag, size = 0x8, scoped, tag = 'scoped memory for tpu_custom_call.1']
    #allocation5 [shape = 'u8[65536]{0}', space=vmem, size = 0x10000, scoped, tag = 'input window, operand 1, single buffered']
    #allocation6 [shape = 's32[1]{0}', space=sflag, size = 0x4, scoped, tag = 'scoped memory for tpu_custom_call.1']
    #allocation7 [shape = 'u8[512]{0}', space=vmem, size = 0x400, scoped, tag = 'input window, operand 2, single buffered']
    #allocation8 [shape = 'u8[65536]{0}', space=vmem, size = 0x10000, scoped, tag = 'input window, operand 3, single buffered']
    #allocation9 [shape = 's32[1]{0}', space=sflag, size = 0x4, scoped, tag = 'scoped memory for tpu_custom_call.1']
    #allocation10 [shape = 'u8[512]{0}', space=vmem, size = 0x400, scoped, tag = 'input window, operand 4, single buffered']
    #allocation11 [shape = 'u8[65536]{0}', space=vmem, size = 0x10000, scoped, tag = 'input window, operand 5, single buffered']
    #allocation12 [shape = 's32[1]{0}', space=sflag, size = 0x4, scoped, tag = 'scoped memory for tpu_custom_call.1']
    #allocation13 [shape = 'u8[512]{0}', space=vmem, size = 0x400, scoped, tag = 'input window, operand 6, single buffered']
    #allocation14 [shape = 'u8[65536]{0}', space=vmem, size = 0x10000, scoped, tag = 'input window, operand 7, single buffered']
    #allocation15 [shape = 's32[1]{0}', space=sflag, size = 0x4, scoped, tag = 'scoped memory for tpu_custom_call.1']
    #allocation16 [shape = 'u8[512]{0}', space=vmem, size = 0x400, scoped, tag = 'input window, operand 8, single buffered']
    #allocation17 [shape = 'u8[65536]{0}', space=vmem, size = 0x10000, scoped, tag = 'input window, operand 9, single buffered']
    #allocation18 [shape = 's32[1]{0}', space=sflag, size = 0x4, scoped, tag = 'scoped memory for tpu_custom_call.1']
    #allocation19 [shape = 'u8[512]{0}', space=vmem, size = 0x400, scoped, tag = 'input window, operand 10, single buffered']
    #allocation20 [shape = 'u8[65536]{0}', space=vmem, size = 0x10000, scoped, tag = 'input window, operand 11, single buffered']
    #allocation21 [shape = 's32[1]{0}', space=sflag, size = 0x4, scoped, tag = 'scoped memory for tpu_custom_call.1']
    #allocation22 [shape = 'u8[512]{0}', space=vmem, size = 0x400, scoped, tag = 'input window, operand 12, single buffered']
    #allocation23 [shape = 'u8[65536]{0}', space=vmem, size = 0x10000, scoped, tag = 'input window, operand 13, single buffered']
    #allocation24 [shape = 's32[1]{0}', space=sflag, size = 0x4, scoped, tag = 'scoped memory for tpu_custom_call.1']
    #allocation25 [shape = 'u8[512]{0}', space=vmem, size = 0x400, scoped, tag = 'input window, operand 14, single buffered']
    #allocation26 [shape = 'u8[65536]{0}', space=vmem, size = 0x10000, scoped, tag = 'input window, operand 15, single buffered']
    #allocation27 [shape = 's32[1]{0}', space=sflag, size = 0x4, scoped, tag = 'scoped memory for tpu_custom_call.1']
    #allocation28 [shape = 'u8[512]{0}', space=vmem, size = 0x400, scoped, tag = 'input window, operand 16, single buffered']
    #allocation29 [shape = 'u8[1310720]{0}', space=vmem, size = 0x140000, scoped, tag = 'output window, operand 0']
    %22 = vsyncpa [#allocation3], 0
    %s23 = scalar_lea.sflag [#allocation3], 1
    %24 = vsyncpa %s23, 0
    %25 = vsyncpa [#allocation6], 0
    %26 = vsyncpa [#allocation9], 0
    %27 = vsyncpa [#allocation12], 0
    %28 = vsyncpa [#allocation15], 0
    %29 = vsyncpa [#allocation18], 0
    %30 = vsyncpa [#allocation21], 0
    %31 = vsyncpa [#allocation24], 0
    %32 = vsyncpa [#allocation27], 0
    %33 = vsyncpa [#allocation4], 0
    %s34 = scalar_lea.sflag [#allocation4], 1
    %35 = vsyncpa %s34, 0
    loop: start=0, step=1, limit=4
    $region2: #{tpu_custom_call.1} parent=1 // loop_pre_header
      _
    $region3: #{tpu_custom_call.1} parent=1 // loop_header
      %s37 = sphi 0, %s41
      %p38 = scmp.ge.s32.totalorder %s37, 4
      %s47 = sphi 0, %s49
      %s50 = sphi 0, %s47
      %s51 = sphi 0, %s50
      %s67 = sphi 0, %s51
      %s71 = sphi 0, %s71
      %s73 = sphi 0, %s71
      %s74 = sphi 0, %s73
      %s88 = sphi 0, %s74
      %s92 = sphi 0, %s92
      %s94 = sphi 0, %s92
      %s95 = sphi 0, %s94
      %s109 = sphi 0, %s95
      %s113 = sphi 0, %s113
      %s115 = sphi 0, %s113
      %s116 = sphi 0, %s115
      %s130 = sphi 0, %s116
      %s134 = sphi 0, %s134
      %s136 = sphi 0, %s134
      %s137 = sphi 0, %s136
      %s151 = sphi 0, %s137
      %s155 = sphi 0, %s155
      %s157 = sphi 0, %s155
      %s158 = sphi 0, %s157
      %s172 = sphi 0, %s158
      %s176 = sphi 0, %s176
      %s178 = sphi 0, %s176
      %s179 = sphi 0, %s178
      %s193 = sphi 0, %s179
      %s197 = sphi 0, %s197
      %s199 = sphi 0, %s197
      %s200 = sphi 0, %s199
      %s214 = sphi 0, %s200
      %s218 = sphi 0, %s218
      %s220 = sphi 0, %s218
      %s221 = sphi 0, %s220
      %s235 = sphi 0, %s221
      %s239 = sphi 0, %s239
      %s241 = sphi 0, %s239
      %s242 = sphi 0, %s241
      %s256 = sphi 0, %s242
      %s260 = sphi 0, %s260
      %s262 = sphi 0, %s260
      %s263 = sphi 0, %s262
      %s277 = sphi 0, %s263
      %s281 = sphi 0, %s281
      %s283 = sphi 0, %s281
      %s284 = sphi 0, %s283
      %s298 = sphi 0, %s284
      %s302 = sphi 0, %s302
      %s304 = sphi 0, %s302
      %s305 = sphi 0, %s304
      %s319 = sphi 0, %s305
      %s323 = sphi 0, %s323
      %s325 = sphi 0, %s323
      %s326 = sphi 0, %s325
      %s340 = sphi 0, %s326
      %s344 = sphi 0, %s344
      %s346 = sphi 0, %s344
      %s347 = sphi 0, %s346
      %s361 = sphi 0, %s347
      %s365 = sphi 0, %s365
      %s367 = sphi 0, %s365
      %s368 = sphi 0, %s367
      %s382 = sphi 0, %s368
      %s386 = sphi 0, %s386
      %s388 = sphi 0, %s386
      %s389 = sphi 0, %s388
      %s403 = sphi 0, %s389
      %s409 = sphi 0, %s411
      %s412 = sphi 0, %s409
      %s413 = sphi 0, %s412
      %s429 = sphi 0, %s413
    $region4: #{tpu_custom_call.1} parent=1 // loop_header_branch
      %40 = sbr.rel (%p38) target = $region8
    $region5: #{tpu_custom_call.1} parent=1 // loop_body
      %s42 = ssub.s32 %s37, 1
      %s43 = ssub.s32 %s37, 2
      %s44 = sadd.s32 %s37, 1
      %s45 = ssub.s32 %s37, %s44
      %p46 = scmp.eq.s32.totalorder %s45, 0
      %s48 = sadd.s32 %s47, 1
      %s49 = scalar_select %p46, %s47, %s48
      %p52 = pneg %p46
      %p53 = scmp.eq.s32.totalorder %s37, 1
      %p54 = por %p52, %p53
      %p55 = scmp.ne.s32.totalorder %s47, %s50
      %p56 = scmp.eq.s32.totalorder %s37, 0
      %p57 = por %p55, %p56
      %p58 = scmp.ne.s32.totalorder %s47, %s50
      %p59 = scmp.eq.s32.totalorder %s42, 1
      %p60 = por %p58, %p59
      %p61 = scmp.ne.s32.totalorder %s50, %s51
      %p62 = scmp.eq.s32.totalorder %s42, 0
      %p63 = por %p61, %p62
      %p64 = scmp.ne.s32.totalorder %s50, %s51
      %p65 = scmp.eq.s32.totalorder %s43, 1
      %p66 = por %p64, %p65
      %p68 = scmp.ne.s32.totalorder %s51, %s67
      %p69 = scmp.eq.s32.totalorder %s43, 0
      %p70 = por %p68, %p69
      %s72 = sadd.s32 %s71, 1
      %p75 = scmp.eq.s32.totalorder %s37, 1
      %p76 = scmp.ne.s32.totalorder %s71, %s73
      %p77 = scmp.eq.s32.totalorder %s37, 0
      %p78 = por %p76, %p77
      %p79 = scmp.ne.s32.totalorder %s71, %s73
      %p80 = scmp.eq.s32.totalorder %s42, 1
      %p81 = por %p79, %p80
      %p82 = scmp.ne.s32.totalorder %s73, %s74
      %p83 = scmp.eq.s32.totalorder %s42, 0
      %p84 = por %p82, %p83
      %p85 = scmp.ne.s32.totalorder %s73, %s74
      %p86 = scmp.eq.s32.totalorder %s43, 1
      %p87 = por %p85, %p86
      %p89 = scmp.ne.s32.totalorder %s74, %s88
      %p90 = scmp.eq.s32.totalorder %s43, 0
      %p91 = por %p89, %p90
      %s93 = sadd.s32 %s92, 1
      %p96 = scmp.eq.s32.totalorder %s37, 1
      %p97 = scmp.ne.s32.totalorder %s92, %s94
      %p98 = scmp.eq.s32.totalorder %s37, 0
      %p99 = por %p97, %p98
      %p100 = scmp.ne.s32.totalorder %s92, %s94
      %p101 = scmp.eq.s32.totalorder %s42, 1
      %p102 = por %p100, %p101
      %p103 = scmp.ne.s32.totalorder %s94, %s95
      %p104 = scmp.eq.s32.totalorder %s42, 0
      %p105 = por %p103, %p104
      %p106 = scmp.ne.s32.totalorder %s94, %s95
      %p107 = scmp.eq.s32.totalorder %s43, 1
      %p108 = por %p106, %p107
      %p110 = scmp.ne.s32.totalorder %s95, %s109
      %p111 = scmp.eq.s32.totalorder %s43, 0
      %p112 = por %p110, %p111
      %s114 = sadd.s32 %s113, 1
      %p117 = scmp.eq.s32.totalorder %s37, 1
      %p118 = scmp.ne.s32.totalorder %s113, %s115
      %p119 = scmp.eq.s32.totalorder %s37, 0
      %p120 = por %p118, %p119
      %p121 = scmp.ne.s32.totalorder %s113, %s115
      %p122 = scmp.eq.s32.totalorder %s42, 1
      %p123 = por %p121, %p122
      %p124 = scmp.ne.s32.totalorder %s115, %s116
      %p125 = scmp.eq.s32.totalorder %s42, 0
      %p126 = por %p124, %p125
      %p127 = scmp.ne.s32.totalorder %s115, %s116
      %p128 = scmp.eq.s32.totalorder %s43, 1
      %p129 = por %p127, %p128
      %p131 = scmp.ne.s32.totalorder %s116, %s130
      %p132 = scmp.eq.s32.totalorder %s43, 0
      %p133 = por %p131, %p132
      %s135 = sadd.s32 %s134, 1
      %p138 = scmp.eq.s32.totalorder %s37, 1
      %p139 = scmp.ne.s32.totalorder %s134, %s136
      %p140 = scmp.eq.s32.totalorder %s37, 0
      %p141 = por %p139, %p140
      %p142 = scmp.ne.s32.totalorder %s134, %s136
      %p143 = scmp.eq.s32.totalorder %s42, 1
      %p144 = por %p142, %p143
      %p145 = scmp.ne.s32.totalorder %s136, %s137
      %p146 = scmp.eq.s32.totalorder %s42, 0
      %p147 = por %p145, %p146
      %p148 = scmp.ne.s32.totalorder %s136, %s137
      %p149 = scmp.eq.s32.totalorder %s43, 1
      %p150 = por %p148, %p149
      %p152 = scmp.ne.s32.totalorder %s137, %s151
      %p153 = scmp.eq.s32.totalorder %s43, 0
      %p154 = por %p152, %p153
      %s156 = sadd.s32 %s155, 1
      %p159 = scmp.eq.s32.totalorder %s37, 1
      %p160 = scmp.ne.s32.totalorder %s155, %s157
      %p161 = scmp.eq.s32.totalorder %s37, 0
      %p162 = por %p160, %p161
      %p163 = scmp.ne.s32.totalorder %s155, %s157
      %p164 = scmp.eq.s32.totalorder %s42, 1
      %p165 = por %p163, %p164
      %p166 = scmp.ne.s32.totalorder %s157, %s158
      %p167 = scmp.eq.s32.totalorder %s42, 0
      %p168 = por %p166, %p167
      %p169 = scmp.ne.s32.totalorder %s157, %s158
      %p170 = scmp.eq.s32.totalorder %s43, 1
      %p171 = por %p169, %p170
      %p173 = scmp.ne.s32.totalorder %s158, %s172
      %p174 = scmp.eq.s32.totalorder %s43, 0
      %p175 = por %p173, %p174
      %s177 = sadd.s32 %s176, 1
      %p180 = scmp.eq.s32.totalorder %s37, 1
      %p181 = scmp.ne.s32.totalorder %s176, %s178
      %p182 = scmp.eq.s32.totalorder %s37, 0
      %p183 = por %p181, %p182
      %p184 = scmp.ne.s32.totalorder %s176, %s178
      %p185 = scmp.eq.s32.totalorder %s42, 1
      %p186 = por %p184, %p185
      %p187 = scmp.ne.s32.totalorder %s178, %s179
      %p188 = scmp.eq.s32.totalorder %s42, 0
      %p189 = por %p187, %p188
      %p190 = scmp.ne.s32.totalorder %s178, %s179
      %p191 = scmp.eq.s32.totalorder %s43, 1
      %p192 = por %p190, %p191
      %p194 = scmp.ne.s32.totalorder %s179, %s193
      %p195 = scmp.eq.s32.totalorder %s43, 0
      %p196 = por %p194, %p195
      %s198 = sadd.s32 %s197, 1
      %p201 = scmp.eq.s32.totalorder %s37, 1
      %p202 = scmp.ne.s32.totalorder %s197, %s199
      %p203 = scmp.eq.s32.totalorder %s37, 0
      %p204 = por %p202, %p203
      %p205 = scmp.ne.s32.totalorder %s197, %s199
      %p206 = scmp.eq.s32.totalorder %s42, 1
      %p207 = por %p205, %p206
      %p208 = scmp.ne.s32.totalorder %s199, %s200
      %p209 = scmp.eq.s32.totalorder %s42, 0
      %p210 = por %p208, %p209
      %p211 = scmp.ne.s32.totalorder %s199, %s200
      %p212 = scmp.eq.s32.totalorder %s43, 1
      %p213 = por %p211, %p212
      %p215 = scmp.ne.s32.totalorder %s200, %s214
      %p216 = scmp.eq.s32.totalorder %s43, 0
      %p217 = por %p215, %p216
      %s219 = sadd.s32 %s218, 1
      %p222 = scmp.eq.s32.totalorder %s37, 1
      %p223 = scmp.ne.s32.totalorder %s218, %s220
      %p224 = scmp.eq.s32.totalorder %s37, 0
      %p225 = por %p223, %p224
      %p226 = scmp.ne.s32.totalorder %s218, %s220
      %p227 = scmp.eq.s32.totalorder %s42, 1
      %p228 = por %p226, %p227
      %p229 = scmp.ne.s32.totalorder %s220, %s221
      %p230 = scmp.eq.s32.totalorder %s42, 0
      %p231 = por %p229, %p230
      %p232 = scmp.ne.s32.totalorder %s220, %s221
      %p233 = scmp.eq.s32.totalorder %s43, 1
      %p234 = por %p232, %p233
      %p236 = scmp.ne.s32.totalorder %s221, %s235
      %p237 = scmp.eq.s32.totalorder %s43, 0
      %p238 = por %p236, %p237
      %s240 = sadd.s32 %s239, 1
      %p243 = scmp.eq.s32.totalorder %s37, 1
      %p244 = scmp.ne.s32.totalorder %s239, %s241
      %p245 = scmp.eq.s32.totalorder %s37, 0
      %p246 = por %p244, %p245
      %p247 = scmp.ne.s32.totalorder %s239, %s241
      %p248 = scmp.eq.s32.totalorder %s42, 1
      %p249 = por %p247, %p248
      %p250 = scmp.ne.s32.totalorder %s241, %s242
      %p251 = scmp.eq.s32.totalorder %s42, 0
      %p252 = por %p250, %p251
      %p253 = scmp.ne.s32.totalorder %s241, %s242
      %p254 = scmp.eq.s32.totalorder %s43, 1
      %p255 = por %p253, %p254
      %p257 = scmp.ne.s32.totalorder %s242, %s256
      %p258 = scmp.eq.s32.totalorder %s43, 0
      %p259 = por %p257, %p258
      %s261 = sadd.s32 %s260, 1
      %p264 = scmp.eq.s32.totalorder %s37, 1
      %p265 = scmp.ne.s32.totalorder %s260, %s262
      %p266 = scmp.eq.s32.totalorder %s37, 0
      %p267 = por %p265, %p266
      %p268 = scmp.ne.s32.totalorder %s260, %s262
      %p269 = scmp.eq.s32.totalorder %s42, 1
      %p270 = por %p268, %p269
      %p271 = scmp.ne.s32.totalorder %s262, %s263
      %p272 = scmp.eq.s32.totalorder %s42, 0
      %p273 = por %p271, %p272
      %p274 = scmp.ne.s32.totalorder %s262, %s263
      %p275 = scmp.eq.s32.totalorder %s43, 1
      %p276 = por %p274, %p275
      %p278 = scmp.ne.s32.totalorder %s263, %s277
      %p279 = scmp.eq.s32.totalorder %s43, 0
      %p280 = por %p278, %p279
      %s282 = sadd.s32 %s281, 1
      %p285 = scmp.eq.s32.totalorder %s37, 1
      %p286 = scmp.ne.s32.totalorder %s281, %s283
      %p287 = scmp.eq.s32.totalorder %s37, 0
      %p288 = por %p286, %p287
      %p289 = scmp.ne.s32.totalorder %s281, %s283
      %p290 = scmp.eq.s32.totalorder %s42, 1
      %p291 = por %p289, %p290
      %p292 = scmp.ne.s32.totalorder %s283, %s284
      %p293 = scmp.eq.s32.totalorder %s42, 0
      %p294 = por %p292, %p293
      %p295 = scmp.ne.s32.totalorder %s283, %s284
      %p296 = scmp.eq.s32.totalorder %s43, 1
      %p297 = por %p295, %p296
      %p299 = scmp.ne.s32.totalorder %s284, %s298
      %p300 = scmp.eq.s32.totalorder %s43, 0
      %p301 = por %p299, %p300
      %s303 = sadd.s32 %s302, 1
      %p306 = scmp.eq.s32.totalorder %s37, 1
      %p307 = scmp.ne.s32.totalorder %s302, %s304
      %p308 = scmp.eq.s32.totalorder %s37, 0
      %p309 = por %p307, %p308
      %p310 = scmp.ne.s32.totalorder %s302, %s304
      %p311 = scmp.eq.s32.totalorder %s42, 1
      %p312 = por %p310, %p311
      %p313 = scmp.ne.s32.totalorder %s304, %s305
      %p314 = scmp.eq.s32.totalorder %s42, 0
      %p315 = por %p313, %p314
      %p316 = scmp.ne.s32.totalorder %s304, %s305
      %p317 = scmp.eq.s32.totalorder %s43, 1
      %p318 = por %p316, %p317
      %p320 = scmp.ne.s32.totalorder %s305, %s319
      %p321 = scmp.eq.s32.totalorder %s43, 0
      %p322 = por %p320, %p321
      %s324 = sadd.s32 %s323, 1
      %p327 = scmp.eq.s32.totalorder %s37, 1
      %p328 = scmp.ne.s32.totalorder %s323, %s325
      %p329 = scmp.eq.s32.totalorder %s37, 0
      %p330 = por %p328, %p329
      %p331 = scmp.ne.s32.totalorder %s323, %s325
      %p332 = scmp.eq.s32.totalorder %s42, 1
      %p333 = por %p331, %p332
      %p334 = scmp.ne.s32.totalorder %s325, %s326
      %p335 = scmp.eq.s32.totalorder %s42, 0
      %p336 = por %p334, %p335
      %p337 = scmp.ne.s32.totalorder %s325, %s326
      %p338 = scmp.eq.s32.totalorder %s43, 1
      %p339 = por %p337, %p338
      %p341 = scmp.ne.s32.totalorder %s326, %s340
      %p342 = scmp.eq.s32.totalorder %s43, 0
      %p343 = por %p341, %p342
      %s345 = sadd.s32 %s344, 1
      %p348 = scmp.eq.s32.totalorder %s37, 1
      %p349 = scmp.ne.s32.totalorder %s344, %s346
      %p350 = scmp.eq.s32.totalorder %s37, 0
      %p351 = por %p349, %p350
      %p352 = scmp.ne.s32.totalorder %s344, %s346
      %p353 = scmp.eq.s32.totalorder %s42, 1
      %p354 = por %p352, %p353
      %p355 = scmp.ne.s32.totalorder %s346, %s347
      %p356 = scmp.eq.s32.totalorder %s42, 0
      %p357 = por %p355, %p356
      %p358 = scmp.ne.s32.totalorder %s346, %s347
      %p359 = scmp.eq.s32.totalorder %s43, 1
      %p360 = por %p358, %p359
      %p362 = scmp.ne.s32.totalorder %s347, %s361
      %p363 = scmp.eq.s32.totalorder %s43, 0
      %p364 = por %p362, %p363
      %s366 = sadd.s32 %s365, 1
      %p369 = scmp.eq.s32.totalorder %s37, 1
      %p370 = scmp.ne.s32.totalorder %s365, %s367
      %p371 = scmp.eq.s32.totalorder %s37, 0
      %p372 = por %p370, %p371
      %p373 = scmp.ne.s32.totalorder %s365, %s367
      %p374 = scmp.eq.s32.totalorder %s42, 1
      %p375 = por %p373, %p374
      %p376 = scmp.ne.s32.totalorder %s367, %s368
      %p377 = scmp.eq.s32.totalorder %s42, 0
      %p378 = por %p376, %p377
      %p379 = scmp.ne.s32.totalorder %s367, %s368
      %p380 = scmp.eq.s32.totalorder %s43, 1
      %p381 = por %p379, %p380
      %p383 = scmp.ne.s32.totalorder %s368, %s382
      %p384 = scmp.eq.s32.totalorder %s43, 0
      %p385 = por %p383, %p384
      %s387 = sadd.s32 %s386, 1
      %p390 = scmp.eq.s32.totalorder %s37, 1
      %p391 = scmp.ne.s32.totalorder %s386, %s388
      %p392 = scmp.eq.s32.totalorder %s37, 0
      %p393 = por %p391, %p392
      %p394 = scmp.ne.s32.totalorder %s386, %s388
      %p395 = scmp.eq.s32.totalorder %s42, 1
      %p396 = por %p394, %p395
      %p397 = scmp.ne.s32.totalorder %s388, %s389
      %p398 = scmp.eq.s32.totalorder %s42, 0
      %p399 = por %p397, %p398
      %p400 = scmp.ne.s32.totalorder %s388, %s389
      %p401 = scmp.eq.s32.totalorder %s43, 1
      %p402 = por %p400, %p401
      %p404 = scmp.ne.s32.totalorder %s389, %s403
      %p405 = scmp.eq.s32.totalorder %s43, 0
      %p406 = por %p404, %p405
      %s407 = ssub.s32 %s37, %s44
      %p408 = scmp.eq.s32.totalorder %s407, 0
      %s410 = sadd.s32 %s409, 1
      %s411 = scalar_select %p408, %s409, %s410
      %p414 = pneg %p408
      %p415 = scmp.eq.s32.totalorder %s37, 1
      %p416 = por %p414, %p415
      %p417 = scmp.ne.s32.totalorder %s409, %s412
      %p418 = scmp.eq.s32.totalorder %s37, 0
      %p419 = por %p417, %p418
      %p420 = scmp.ne.s32.totalorder %s409, %s412
      %p421 = scmp.eq.s32.totalorder %s42, 1
      %p422 = por %p420, %p421
      %p423 = scmp.ne.s32.totalorder %s412, %s413
      %p424 = scmp.eq.s32.totalorder %s42, 0
      %p425 = por %p423, %p424
      %p426 = scmp.ne.s32.totalorder %s412, %s413
      %p427 = scmp.eq.s32.totalorder %s43, 1
      %p428 = por %p426, %p427
      %p430 = scmp.ne.s32.totalorder %s413, %s429
      %p431 = scmp.eq.s32.totalorder %s43, 0
      %p432 = por %p430, %p431
      %p433 = scmp.le.s32.totalorder 1, %s37
      %p434 = scmp.lt.s32.totalorder %s37, 3
      %p435 = pnand %p433, %p434
      %p436 = pneg %p435
      // Predicated region
      $region9: #{tpu_custom_call.1} parent=5 // pred_check
        _
      $region10: #{tpu_custom_call.1} parent=5 // pred_check_branch
        %438 = sbr.rel (%p435) target = $region12
      $region11: #{tpu_custom_call.1} parent=5 // pred_region
        %s439 = ssub.s32 %s37, 1
        // Predicated region
        $region13: #{tpu_custom_call.1} parent=11 // pred_check
          %p440 = pneg %p84
        $region14: #{tpu_custom_call.1} parent=11 // pred_check_branch
          %442 = sbr.rel (%p440) target = $region16
        $region15: #{tpu_custom_call.1} parent=11 // pred_region
          %444 = vsyncadd [#allocation6], 0
          %s445 = sshll.u32 %s1, 4
          %s446 = int_to_ptr.hbm [resolvable:$true] %s445
          %s447 = sshll.u32 [#allocation5], 4
          %s448 = int_to_ptr.vmem [resolvable:$true] %s447
          %453 = dma.hbm_to_vmem [thread:$0]  %s446, 2048, %s448, [#allocation6], 128, 128, 8
        $region16: #{tpu_custom_call.1} parent=11 // pred_fallthru
          _
        // Predicated region
        $region17: #{tpu_custom_call.1} parent=11 // pred_check
          %p454 = pneg %p105
        $region18: #{tpu_custom_call.1} parent=11 // pred_check_branch
          %456 = sbr.rel (%p454) target = $region20
        $region19: #{tpu_custom_call.1} parent=11 // pred_region
          %458 = vsyncadd [#allocation6], 0
          %s460 = sshll.u32 %s2, 4
          %s461 = int_to_ptr.hbm [resolvable:$true] %s460
          %s462 = sshll.u32 [#allocation7], 4
          %s463 = int_to_ptr.vmem [resolvable:$true] %s462
          %465 = dma.hbm_to_vmem [thread:$0]  %s461, 16, %s463, [#allocation6]
        $region20: #{tpu_custom_call.1} parent=11 // pred_fallthru
          _
        // Predicated region
        $region21: #{tpu_custom_call.1} parent=11 // pred_check
          %p466 = pneg %p126
        $region22: #{tpu_custom_call.1} parent=11 // pred_check_branch
          %468 = sbr.rel (%p466) target = $region24
        $region23: #{tpu_custom_call.1} parent=11 // pred_region
          %470 = vsyncadd [#allocation9], 0
          %s471 = sshll.u32 %s3, 4
          %s472 = int_to_ptr.hbm [resolvable:$true] %s471
          %s473 = sshll.u32 [#allocation8], 4
          %s474 = int_to_ptr.vmem [resolvable:$true] %s473
          %479 = dma.hbm_to_vmem [thread:$0]  %s472, 2048, %s474, [#allocation9], 128, 128, 8
        $region24: #{tpu_custom_call.1} parent=11 // pred_fallthru
          _
        // Predicated region
        $region25: #{tpu_custom_call.1} parent=11 // pred_check
          %p480 = pneg %p147
        $region26: #{tpu_custom_call.1} parent=11 // pred_check_branch
          %482 = sbr.rel (%p480) target = $region28
        $region27: #{tpu_custom_call.1} parent=11 // pred_region
          %484 = vsyncadd [#allocation9], 0
          %s486 = sshll.u32 %s4, 4
          %s487 = int_to_ptr.hbm [resolvable:$true] %s486
          %s488 = sshll.u32 [#allocation10], 4
          %s489 = int_to_ptr.vmem [resolvable:$true] %s488
          %491 = dma.hbm_to_vmem [thread:$0]  %s487, 16, %s489, [#allocation9]
        $region28: #{tpu_custom_call.1} parent=11 // pred_fallthru
          _
        // Predicated region
        $region29: #{tpu_custom_call.1} parent=11 // pred_check
          %p492 = pneg %p168
        $region30: #{tpu_custom_call.1} parent=11 // pred_check_branch
          %494 = sbr.rel (%p492) target = $region32
        $region31: #{tpu_custom_call.1} parent=11 // pred_region
          %496 = vsyncadd [#allocation12], 0
          %s497 = sshll.u32 %s5, 4
          %s498 = int_to_ptr.hbm [resolvable:$true] %s497
          %s499 = sshll.u32 [#allocation11], 4
          %s500 = int_to_ptr.vmem [resolvable:$true] %s499
          %505 = dma.hbm_to_vmem [thread:$0]  %s498, 2048, %s500, [#allocation12], 128, 128, 8
        $region32: #{tpu_custom_call.1} parent=11 // pred_fallthru
          _
        // Predicated region
        $region33: #{tpu_custom_call.1} parent=11 // pred_check
          %p506 = pneg %p189
        $region34: #{tpu_custom_call.1} parent=11 // pred_check_branch
          %508 = sbr.rel (%p506) target = $region36
        $region35: #{tpu_custom_call.1} parent=11 // pred_region
          %510 = vsyncadd [#allocation12], 0
          %s512 = sshll.u32 %s6, 4
          %s513 = int_to_ptr.hbm [resolvable:$true] %s512
          %s514 = sshll.u32 [#allocation13], 4
          %s515 = int_to_ptr.vmem [resolvable:$true] %s514
          %517 = dma.hbm_to_vmem [thread:$0]  %s513, 16, %s515, [#allocation12]
        $region36: #{tpu_custom_call.1} parent=11 // pred_fallthru
          _
        // Predicated region
        $region37: #{tpu_custom_call.1} parent=11 // pred_check
          %p518 = pneg %p210
        $region38: #{tpu_custom_call.1} parent=11 // pred_check_branch
          %520 = sbr.rel (%p518) target = $region40
        $region39: #{tpu_custom_call.1} parent=11 // pred_region
          %522 = vsyncadd [#allocation15], 0
          %s523 = sshll.u32 %s7, 4
          %s524 = int_to_ptr.hbm [resolvable:$true] %s523
          %s525 = sshll.u32 [#allocation14], 4
          %s526 = int_to_ptr.vmem [resolvable:$true] %s525
          %531 = dma.hbm_to_vmem [thread:$0]  %s524, 2048, %s526, [#allocation15], 128, 128, 8
        $region40: #{tpu_custom_call.1} parent=11 // pred_fallthru
          _
        // Predicated region
        $region41: #{tpu_custom_call.1} parent=11 // pred_check
          %p532 = pneg %p231
        $region42: #{tpu_custom_call.1} parent=11 // pred_check_branch
          %534 = sbr.rel (%p532) target = $region44
        $region43: #{tpu_custom_call.1} parent=11 // pred_region
          %536 = vsyncadd [#allocation15], 0
          %s538 = sshll.u32 %s8, 4
          %s539 = int_to_ptr.hbm [resolvable:$true] %s538
          %s540 = sshll.u32 [#allocation16], 4
          %s541 = int_to_ptr.vmem [resolvable:$true] %s540
          %543 = dma.hbm_to_vmem [thread:$0]  %s539, 16, %s541, [#allocation15]
        $region44: #{tpu_custom_call.1} parent=11 // pred_fallthru
          _
        // Predicated region
        $region45: #{tpu_custom_call.1} parent=11 // pred_check
          %p544 = pneg %p252
        $region46: #{tpu_custom_call.1} parent=11 // pred_check_branch
          %546 = sbr.rel (%p544) target = $region48
        $region47: #{tpu_custom_call.1} parent=11 // pred_region
          %548 = vsyncadd [#allocation18], 0
          %s549 = sshll.u32 %s9, 4
          %s550 = int_to_ptr.hbm [resolvable:$true] %s549
          %s551 = sshll.u32 [#allocation17], 4
          %s552 = int_to_ptr.vmem [resolvable:$true] %s551
          %557 = dma.hbm_to_vmem [thread:$0]  %s550, 2048, %s552, [#allocation18], 128, 128, 8
        $region48: #{tpu_custom_call.1} parent=11 // pred_fallthru
          _
        // Predicated region
        $region49: #{tpu_custom_call.1} parent=11 // pred_check
          %p558 = pneg %p273
        $region50: #{tpu_custom_call.1} parent=11 // pred_check_branch
          %560 = sbr.rel (%p558) target = $region52
        $region51: #{tpu_custom_call.1} parent=11 // pred_region
          %562 = vsyncadd [#allocation18], 0
          %s564 = sshll.u32 %s10, 4
          %s565 = int_to_ptr.hbm [resolvable:$true] %s564
          %s566 = sshll.u32 [#allocation19], 4
          %s567 = int_to_ptr.vmem [resolvable:$true] %s566
          %569 = dma.hbm_to_vmem [thread:$0]  %s565, 16, %s567, [#allocation18]
        $region52: #{tpu_custom_call.1} parent=11 // pred_fallthru
          _
        // Predicated region
        $region53: #{tpu_custom_call.1} parent=11 // pred_check
          %p570 = pneg %p294
        $region54: #{tpu_custom_call.1} parent=11 // pred_check_branch
          %572 = sbr.rel (%p570) target = $region56
        $region55: #{tpu_custom_call.1} parent=11 // pred_region
          %574 = vsyncadd [#allocation21], 0
          %s575 = sshll.u32 %s11, 4
          %s576 = int_to_ptr.hbm [resolvable:$true] %s575
          %s577 = sshll.u32 [#allocation20], 4
          %s578 = int_to_ptr.vmem [resolvable:$true] %s577
          %583 = dma.hbm_to_vmem [thread:$0]  %s576, 2048, %s578, [#allocation21], 128, 128, 8
        $region56: #{tpu_custom_call.1} parent=11 // pred_fallthru
          _
        // Predicated region
        $region57: #{tpu_custom_call.1} parent=11 // pred_check
          %p584 = pneg %p315
        $region58: #{tpu_custom_call.1} parent=11 // pred_check_branch
          %586 = sbr.rel (%p584) target = $region60
        $region59: #{tpu_custom_call.1} parent=11 // pred_region
          %588 = vsyncadd [#allocation21], 0
          %s590 = sshll.u32 %s12, 4
          %s591 = int_to_ptr.hbm [resolvable:$true] %s590
          %s592 = sshll.u32 [#allocation22], 4
          %s593 = int_to_ptr.vmem [resolvable:$true] %s592
          %595 = dma.hbm_to_vmem [thread:$0]  %s591, 16, %s593, [#allocation21]
        $region60: #{tpu_custom_call.1} parent=11 // pred_fallthru
          _
        // Predicated region
        $region61: #{tpu_custom_call.1} parent=11 // pred_check
          %p596 = pneg %p336
        $region62: #{tpu_custom_call.1} parent=11 // pred_check_branch
          %598 = sbr.rel (%p596) target = $region64
        $region63: #{tpu_custom_call.1} parent=11 // pred_region
          %600 = vsyncadd [#allocation24], 0
          %s601 = sshll.u32 %s13, 4
          %s602 = int_to_ptr.hbm [resolvable:$true] %s601
          %s603 = sshll.u32 [#allocation23], 4
          %s604 = int_to_ptr.vmem [resolvable:$true] %s603
          %609 = dma.hbm_to_vmem [thread:$0]  %s602, 2048, %s604, [#allocation24], 128, 128, 8
        $region64: #{tpu_custom_call.1} parent=11 // pred_fallthru
          _
        // Predicated region
        $region65: #{tpu_custom_call.1} parent=11 // pred_check
          %p610 = pneg %p357
        $region66: #{tpu_custom_call.1} parent=11 // pred_check_branch
          %612 = sbr.rel (%p610) target = $region68
        $region67: #{tpu_custom_call.1} parent=11 // pred_region
          %614 = vsyncadd [#allocation24], 0
          %s616 = sshll.u32 %s14, 4
          %s617 = int_to_ptr.hbm [resolvable:$true] %s616
          %s618 = sshll.u32 [#allocation25], 4
          %s619 = int_to_ptr.vmem [resolvable:$true] %s618
          %621 = dma.hbm_to_vmem [thread:$0]  %s617, 16, %s619, [#allocation24]
        $region68: #{tpu_custom_call.1} parent=11 // pred_fallthru
          _
        // Predicated region
        $region69: #{tpu_custom_call.1} parent=11 // pred_check
          %p622 = pneg %p378
        $region70: #{tpu_custom_call.1} parent=11 // pred_check_branch
          %624 = sbr.rel (%p622) target = $region72
        $region71: #{tpu_custom_call.1} parent=11 // pred_region
          %626 = vsyncadd [#allocation27], 0
          %s627 = sshll.u32 %s15, 4
          %s628 = int_to_ptr.hbm [resolvable:$true] %s627
          %s629 = sshll.u32 [#allocation26], 4
          %s630 = int_to_ptr.vmem [resolvable:$true] %s629
          %635 = dma.hbm_to_vmem [thread:$0]  %s628, 2048, %s630, [#allocation27], 128, 128, 8
        $region72: #{tpu_custom_call.1} parent=11 // pred_fallthru
          _
        // Predicated region
        $region73: #{tpu_custom_call.1} parent=11 // pred_check
          %p636 = pneg %p399
        $region74: #{tpu_custom_call.1} parent=11 // pred_check_branch
          %638 = sbr.rel (%p636) target = $region76
        $region75: #{tpu_custom_call.1} parent=11 // pred_region
          %640 = vsyncadd [#allocation27], 0
          %s642 = sshll.u32 %s16, 4
          %s643 = int_to_ptr.hbm [resolvable:$true] %s642
          %s644 = sshll.u32 [#allocation28], 4
          %s645 = int_to_ptr.vmem [resolvable:$true] %s644
          %647 = dma.hbm_to_vmem [thread:$0]  %s643, 16, %s645, [#allocation27]
        $region76: #{tpu_custom_call.1} parent=11 // pred_fallthru
          _
      $region12: #{tpu_custom_call.1} parent=5 // pred_fallthru
        _
      %p648 = scmp.lt.s32.totalorder %s37, 2
      // Predicated region
      $region77: #{tpu_custom_call.1} parent=5 // pred_check
        %p649 = pneg %p648
      $region78: #{tpu_custom_call.1} parent=5 // pred_check_branch
        %651 = sbr.rel (%p649) target = $region80
      $region79: #{tpu_custom_call.1} parent=5 // pred_region
        // Predicated region
        $region81: #{tpu_custom_call.1} parent=79 // pred_check
          %p652 = pneg %p57
        $region82: #{tpu_custom_call.1} parent=79 // pred_check_branch
          %654 = sbr.rel (%p652) target = $region84
        $region83: #{tpu_custom_call.1} parent=79 // pred_region
          %s655 = sand.u32 %s47, 1
          %s656 = scalar_lea.sflag [#allocation3], %s655
          %s657 = sand.u32 %s47, 1
          %s658 = smul.addr %s657, 256
          %s659 = scalar_lea.vmem [#allocation2], %s658
          %s660 = smul.u32 32, %s37
          %662 = vsyncadd %s656, 0
          %s663 = smul.addr %s660, 8
          %s664 = scalar_lea.hbm %s0, %s663
          %s665 = sshll.u32 %s664, 4
          %s666 = int_to_ptr.hbm [resolvable:$true] %s665
          %s667 = sshll.u32 %s659, 4
          %s668 = int_to_ptr.vmem [resolvable:$true] %s667
          %673 = dma.hbm_to_vmem [thread:$0]  %s666, 4096, %s668, %s656, 128, 128, 8
        $region84: #{tpu_custom_call.1} parent=79 // pred_fallthru
          _
      $region80: #{tpu_custom_call.1} parent=5 // pred_fallthru
        _
      %p674 = scmp.le.s32.totalorder 1, %s37
      %p675 = scmp.lt.s32.totalorder %s37, 3
      %p676 = pnand %p674, %p675
      %p677 = pneg %p676
      // Predicated region
      $region85: #{tpu_custom_call.1} parent=5 // pred_check
        _
      $region86: #{tpu_custom_call.1} parent=5 // pred_check_branch
        %679 = sbr.rel (%p676) target = $region88
      $region87: #{tpu_custom_call.1} parent=5 // pred_region
        %s680 = ssub.s32 %s37, 1
        %s681 = sand.u32 %s50, 1
        %s682 = scalar_lea.sflag [#allocation3], %s681
        %s683 = sand.u32 %s50, 1
        %s684 = smul.addr %s683, 256
        %s685 = scalar_lea.vmem [#allocation2], %s684
        // Predicated region
        $region89: #{tpu_custom_call.1} parent=87 // pred_check
          %p686 = pneg %p63
        $region90: #{tpu_custom_call.1} parent=87 // pred_check_branch
          %688 = sbr.rel (%p686) target = $region92
        $region91: #{tpu_custom_call.1} parent=87 // pred_region
          %690 = dma.done %s682, 4096
        $region92: #{tpu_custom_call.1} parent=87 // pred_fallthru
          _
        // Predicated region
        $region93: #{tpu_custom_call.1} parent=87 // pred_check
          %p691 = pneg %p84
        $region94: #{tpu_custom_call.1} parent=87 // pred_check_branch
          %693 = sbr.rel (%p691) target = $region96
        $region95: #{tpu_custom_call.1} parent=87 // pred_region
          %695 = dma.done [#allocation6], 2048
        $region96: #{tpu_custom_call.1} parent=87 // pred_fallthru
          _
        // Predicated region
        $region97: #{tpu_custom_call.1} parent=87 // pred_check
          %p696 = pneg %p105
        $region98: #{tpu_custom_call.1} parent=87 // pred_check_branch
          %698 = sbr.rel (%p696) target = $region100
        $region99: #{tpu_custom_call.1} parent=87 // pred_region
          %700 = dma.done [#allocation6], 16
        $region100: #{tpu_custom_call.1} parent=87 // pred_fallthru
          _
        // Predicated region
        $region101: #{tpu_custom_call.1} parent=87 // pred_check
          %p701 = pneg %p126
        $region102: #{tpu_custom_call.1} parent=87 // pred_check_branch
          %703 = sbr.rel (%p701) target = $region104
        $region103: #{tpu_custom_call.1} parent=87 // pred_region
          %705 = dma.done [#allocation9], 2048
        $region104: #{tpu_custom_call.1} parent=87 // pred_fallthru
          _
        // Predicated region
        $region105: #{tpu_custom_call.1} parent=87 // pred_check
          %p706 = pneg %p147
        $region106: #{tpu_custom_call.1} parent=87 // pred_check_branch
          %708 = sbr.rel (%p706) target = $region108
        $region107: #{tpu_custom_call.1} parent=87 // pred_region
          %710 = dma.done [#allocation9], 16
        $region108: #{tpu_custom_call.1} parent=87 // pred_fallthru
          _
        // Predicated region
        $region109: #{tpu_custom_call.1} parent=87 // pred_check
          %p711 = pneg %p168
        $region110: #{tpu_custom_call.1} parent=87 // pred_check_branch
          %713 = sbr.rel (%p711) target = $region112
        $region111: #{tpu_custom_call.1} parent=87 // pred_region
          %715 = dma.done [#allocation12], 2048
        $region112: #{tpu_custom_call.1} parent=87 // pred_fallthru
          _
        // Predicated region
        $region113: #{tpu_custom_call.1} parent=87 // pred_check
          %p716 = pneg %p189
        $region114: #{tpu_custom_call.1} parent=87 // pred_check_branch
          %718 = sbr.rel (%p716) target = $region116
        $region115: #{tpu_custom_call.1} parent=87 // pred_region
          %720 = dma.done [#allocation12], 16
        $region116: #{tpu_custom_call.1} parent=87 // pred_fallthru
          _
        // Predicated region
        $region117: #{tpu_custom_call.1} parent=87 // pred_check
          %p721 = pneg %p210
        $region118: #{tpu_custom_call.1} parent=87 // pred_check_branch
          %723 = sbr.rel (%p721) target = $region120
        $region119: #{tpu_custom_call.1} parent=87 // pred_region
          %725 = dma.done [#allocation15], 2048
        $region120: #{tpu_custom_call.1} parent=87 // pred_fallthru
          _
        // Predicated region
        $region121: #{tpu_custom_call.1} parent=87 // pred_check
          %p726 = pneg %p231
        $region122: #{tpu_custom_call.1} parent=87 // pred_check_branch
          %728 = sbr.rel (%p726) target = $region124
        $region123: #{tpu_custom_call.1} parent=87 // pred_region
          %730 = dma.done [#allocation15], 16
        $region124: #{tpu_custom_call.1} parent=87 // pred_fallthru
          _
        // Predicated region
        $region125: #{tpu_custom_call.1} parent=87 // pred_check
          %p731 = pneg %p252
        $region126: #{tpu_custom_call.1} parent=87 // pred_check_branch
          %733 = sbr.rel (%p731) target = $region128
        $region127: #{tpu_custom_call.1} parent=87 // pred_region
          %735 = dma.done [#allocation18], 2048
        $region128: #{tpu_custom_call.1} parent=87 // pred_fallthru
          _
        // Predicated region
        $region129: #{tpu_custom_call.1} parent=87 // pred_check
          %p736 = pneg %p273
        $region130: #{tpu_custom_call.1} parent=87 // pred_check_branch
          %738 = sbr.rel (%p736) target = $region132
        $region131: #{tpu_custom_call.1} parent=87 // pred_region
          %740 = dma.done [#allocation18], 16
        $region132: #{tpu_custom_call.1} parent=87 // pred_fallthru
          _
        // Predicated region
        $region133: #{tpu_custom_call.1} parent=87 // pred_check
          %p741 = pneg %p294
        $region134: #{tpu_custom_call.1} parent=87 // pred_check_branch
          %743 = sbr.rel (%p741) target = $region136
        $region135: #{tpu_custom_call.1} parent=87 // pred_region
          %745 = dma.done [#allocation21], 2048
        $region136: #{tpu_custom_call.1} parent=87 // pred_fallthru
          _
        // Predicated region
        $region137: #{tpu_custom_call.1} parent=87 // pred_check
          %p746 = pneg %p315
        $region138: #{tpu_custom_call.1} parent=87 // pred_check_branch
          %748 = sbr.rel (%p746) target = $region140
        $region139: #{tpu_custom_call.1} parent=87 // pred_region
          %750 = dma.done [#allocation21], 16
        $region140: #{tpu_custom_call.1} parent=87 // pred_fallthru
          _
        // Predicated region
        $region141: #{tpu_custom_call.1} parent=87 // pred_check
          %p751 = pneg %p336
        $region142: #{tpu_custom_call.1} parent=87 // pred_check_branch
          %753 = sbr.rel (%p751) target = $region144
        $region143: #{tpu_custom_call.1} parent=87 // pred_region
          %755 = dma.done [#allocation24], 2048
        $region144: #{tpu_custom_call.1} parent=87 // pred_fallthru
          _
        // Predicated region
        $region145: #{tpu_custom_call.1} parent=87 // pred_check
          %p756 = pneg %p357
        $region146: #{tpu_custom_call.1} parent=87 // pred_check_branch
          %758 = sbr.rel (%p756) target = $region148
        $region147: #{tpu_custom_call.1} parent=87 // pred_region
          %760 = dma.done [#allocation24], 16
        $region148: #{tpu_custom_call.1} parent=87 // pred_fallthru
          _
        // Predicated region
        $region149: #{tpu_custom_call.1} parent=87 // pred_check
          %p761 = pneg %p378
        $region150: #{tpu_custom_call.1} parent=87 // pred_check_branch
          %763 = sbr.rel (%p761) target = $region152
        $region151: #{tpu_custom_call.1} parent=87 // pred_region
          %765 = dma.done [#allocation27], 2048
        $region152: #{tpu_custom_call.1} parent=87 // pred_fallthru
          _
        // Predicated region
        $region153: #{tpu_custom_call.1} parent=87 // pred_check
          %p766 = pneg %p399
        $region154: #{tpu_custom_call.1} parent=87 // pred_check_branch
          %768 = sbr.rel (%p766) target = $region156
        $region155: #{tpu_custom_call.1} parent=87 // pred_region
          %770 = dma.done [#allocation27], 16
        $region156: #{tpu_custom_call.1} parent=87 // pred_fallthru
          _
        %s771 = sand.u32 %s50, 1
        %s772 = scalar_lea.sflag [#allocation3], %s771
        %s773 = sand.u32 %s50, 1
        %s774 = smul.addr %s773, 256
        %s775 = scalar_lea.vmem [#allocation2], %s774
        %p776 = pneg %p63
        %p777 = pneg %p60
        %p778 = pneg %p84
        %p779 = pneg %p81
        %p780 = pneg %p105
        %p781 = pneg %p102
        %p782 = pneg %p126
        %p783 = pneg %p123
        %p784 = pneg %p147
        %p785 = pneg %p144
        %p786 = pneg %p168
        %p787 = pneg %p165
        %p788 = pneg %p189
        %p789 = pneg %p186
        %p790 = pneg %p210
        %p791 = pneg %p207
        %p792 = pneg %p231
        %p793 = pneg %p228
        %p794 = pneg %p252
        %p795 = pneg %p249
        %p796 = pneg %p273
        %p797 = pneg %p270
        %p798 = pneg %p294
        %p799 = pneg %p291
        %p800 = pneg %p315
        %p801 = pneg %p312
        %p802 = pneg %p336
        %p803 = pneg %p333
        %p804 = pneg %p357
        %p805 = pneg %p354
        %p806 = pneg %p378
        %p807 = pneg %p375
        %p808 = pneg %p399
        %p809 = pneg %p396
        %p810 = pneg %p425
        %p811 = pneg %p422
        %s812 = sand.u32 %s412, 1
        %s813 = scalar_lea.sflag [#allocation4], %s812
        %s814 = sand.u32 %s412, 1
        %s815 = smul.addr %s814, 1280
        %s816 = scalar_lea.vmem [#allocation29], %s815
        %s817 = smul.u32 32, %s42
        %s818 = smul.u32 32, %s42
        %v819 = vld [vmem:[%s685] sm:$0xff]
        %v820 = vld [vmem:[%s685 + $0x8] sm:$0xff]
        %v821 = vld [vmem:[%s685 + $0x10] sm:$0xff]
        %v822 = vld [vmem:[%s685 + $0x18] sm:$0xff]
        %v823 = vld [vmem:[%s685 + $0x20] sm:$0xff]
        %v824 = vld [vmem:[%s685 + $0x28] sm:$0xff]
        %v825 = vld [vmem:[%s685 + $0x30] sm:$0xff]
        %v826 = vld [vmem:[%s685 + $0x38] sm:$0xff]
        %v827 = vld [vmem:[%s685 + $0x40] sm:$0xff]
        %v828 = vld [vmem:[%s685 + $0x48] sm:$0xff]
        %v829 = vld [vmem:[%s685 + $0x50] sm:$0xff]
        %v830 = vld [vmem:[%s685 + $0x58] sm:$0xff]
        %v831 = vld [vmem:[%s685 + $0x60] sm:$0xff]
        %v832 = vld [vmem:[%s685 + $0x68] sm:$0xff]
        %v833 = vld [vmem:[%s685 + $0x70] sm:$0xff]
        %v834 = vld [vmem:[%s685 + $0x78] sm:$0xff]
        %v835 = vld [vmem:[%s685 + $0x80] sm:$0xff]
        %v836 = vld [vmem:[%s685 + $0x88] sm:$0xff]
        %v837 = vld [vmem:[%s685 + $0x90] sm:$0xff]
        %v838 = vld [vmem:[%s685 + $0x98] sm:$0xff]
        %v839 = vld [vmem:[%s685 + $0xa0] sm:$0xff]
        %v840 = vld [vmem:[%s685 + $0xa8] sm:$0xff]
        %v841 = vld [vmem:[%s685 + $0xb0] sm:$0xff]
        %v842 = vld [vmem:[%s685 + $0xb8] sm:$0xff]
        %v843 = vld [vmem:[%s685 + $0xc0] sm:$0xff]
        %v844 = vld [vmem:[%s685 + $0xc8] sm:$0xff]
        %v845 = vld [vmem:[%s685 + $0xd0] sm:$0xff]
        %v846 = vld [vmem:[%s685 + $0xd8] sm:$0xff]
        %v847 = vld [vmem:[%s685 + $0xe0] sm:$0xff]
        %v848 = vld [vmem:[%s685 + $0xe8] sm:$0xff]
        %v849 = vld [vmem:[%s685 + $0xf0] sm:$0xff]
        %v850 = vld [vmem:[%s685 + $0xf8] sm:$0xff]
        %v851 = vld [vmem:[#allocation5] sm:$0xff]
        %v852 = vld [vmem:[#allocation5 + $0x8] sm:$0xff]
        %v853 = vld [vmem:[#allocation5 + $0x10] sm:$0xff]
        %v854 = vld [vmem:[#allocation5 + $0x18] sm:$0xff]
        %v855 = vld [vmem:[#allocation5 + $0x20] sm:$0xff]
        %v856 = vld [vmem:[#allocation5 + $0x28] sm:$0xff]
        %v857 = vld [vmem:[#allocation5 + $0x30] sm:$0xff]
        %v858 = vld [vmem:[#allocation5 + $0x38] sm:$0xff]
        %v859 = vld [vmem:[#allocation5 + $0x40] sm:$0xff]
        %v860 = vld [vmem:[#allocation5 + $0x48] sm:$0xff]
        %v861 = vld [vmem:[#allocation5 + $0x50] sm:$0xff]
        %v862 = vld [vmem:[#allocation5 + $0x58] sm:$0xff]
        %v863 = vld [vmem:[#allocation5 + $0x60] sm:$0xff]
        %v864 = vld [vmem:[#allocation5 + $0x68] sm:$0xff]
        %v865 = vld [vmem:[#allocation5 + $0x70] sm:$0xff]
        %v866 = vld [vmem:[#allocation5 + $0x78] sm:$0xff]
        %v867 = vld [vmem:[#allocation7] sm:$0x1]
        %v869 = vperm.slane %v867, 0
        %871 = vmatpush.msra.mxu0 %v866
        %872 = vmatpush.msra.mxu0 %v865
        %873 = vmatpush.msra.mxu0 %v864
        %874 = vmatpush.msra.mxu0 %v863
        %875 = vmatpush.msra.mxu0 %v862
        %876 = vmatpush.msra.mxu0 %v861
        %877 = vmatpush.msra.mxu0 %v860
        %878 = vmatpush.msra.mxu0 %v859
        %879 = vmatpush.msra.mxu0 %v858
        %880 = vmatpush.msra.mxu0 %v857
        %881 = vmatpush.msra.mxu0 %v856
        %882 = vmatpush.msra.mxu0 %v855
        %883 = vmatpush.msra.mxu0 %v854
        %884 = vmatpush.msra.mxu0 %v853
        %885 = vmatpush.msra.mxu0 %v852
        %886 = vmatpush.msra.mxu0 %v851
        %887 = vmatmul.f32.gmra.mxu0 %v819
        %v888 = vpop.f32.mrf.mxu0
        %v889 = vadd.f32 %v869, %v888
        %890 = vmatmul.f32.gmra.mxu0 %v820
        %v891 = vpop.f32.mrf.mxu0
        %v892 = vadd.f32 %v869, %v891
        %893 = vmatmul.f32.gmra.mxu0 %v821
        %v894 = vpop.f32.mrf.mxu0
        %v895 = vadd.f32 %v869, %v894
        %896 = vmatmul.f32.gmra.mxu0 %v822
        %v897 = vpop.f32.mrf.mxu0
        %v898 = vadd.f32 %v869, %v897
        %899 = vmatmul.f32.gmra.mxu0 %v823
        %v900 = vpop.f32.mrf.mxu0
        %v901 = vadd.f32 %v869, %v900
        %902 = vmatmul.f32.gmra.mxu0 %v824
        %v903 = vpop.f32.mrf.mxu0
        %v904 = vadd.f32 %v869, %v903
        %905 = vmatmul.f32.gmra.mxu0 %v825
        %v906 = vpop.f32.mrf.mxu0
        %v907 = vadd.f32 %v869, %v906
        %908 = vmatmul.f32.gmra.mxu0 %v826
        %v909 = vpop.f32.mrf.mxu0
        %v910 = vadd.f32 %v869, %v909
        %911 = vmatmul.f32.gmra.mxu0 %v827
        %v912 = vpop.f32.mrf.mxu0
        %v913 = vadd.f32 %v869, %v912
        %914 = vmatmul.f32.gmra.mxu0 %v828
        %v915 = vpop.f32.mrf.mxu0
        %v916 = vadd.f32 %v869, %v915
        %917 = vmatmul.f32.gmra.mxu0 %v829
        %v918 = vpop.f32.mrf.mxu0
        %v919 = vadd.f32 %v869, %v918
        %920 = vmatmul.f32.gmra.mxu0 %v830
        %v921 = vpop.f32.mrf.mxu0
        %v922 = vadd.f32 %v869, %v921
        %923 = vmatmul.f32.gmra.mxu0 %v831
        %v924 = vpop.f32.mrf.mxu0
        %v925 = vadd.f32 %v869, %v924
        %926 = vmatmul.f32.gmra.mxu0 %v832
        %v927 = vpop.f32.mrf.mxu0
        %v928 = vadd.f32 %v869, %v927
        %929 = vmatmul.f32.gmra.mxu0 %v833
        %v930 = vpop.f32.mrf.mxu0
        %v931 = vadd.f32 %v869, %v930
        %932 = vmatmul.f32.gmra.mxu0 %v834
        %v933 = vpop.f32.mrf.mxu0
        %v934 = vadd.f32 %v869, %v933
        %935 = vmatmul.f32.gmra.mxu0 %v835
        %v936 = vpop.f32.mrf.mxu0
        %v937 = vadd.f32 %v869, %v936
        %938 = vmatmul.f32.gmra.mxu0 %v836
        %v939 = vpop.f32.mrf.mxu0
        %v940 = vadd.f32 %v869, %v939
        %941 = vmatmul.f32.gmra.mxu0 %v837
        %v942 = vpop.f32.mrf.mxu0
        %v943 = vadd.f32 %v869, %v942
        %944 = vmatmul.f32.gmra.mxu0 %v838
        %v945 = vpop.f32.mrf.mxu0
        %v946 = vadd.f32 %v869, %v945
        %947 = vmatmul.f32.gmra.mxu0 %v839
        %v948 = vpop.f32.mrf.mxu0
        %v949 = vadd.f32 %v869, %v948
        %950 = vmatmul.f32.gmra.mxu0 %v840
        %v951 = vpop.f32.mrf.mxu0
        %v952 = vadd.f32 %v869, %v951
        %953 = vmatmul.f32.gmra.mxu0 %v841
        %v954 = vpop.f32.mrf.mxu0
        %v955 = vadd.f32 %v869, %v954
        %956 = vmatmul.f32.gmra.mxu0 %v842
        %v957 = vpop.f32.mrf.mxu0
        %v958 = vadd.f32 %v869, %v957
        %959 = vmatmul.f32.gmra.mxu0 %v843
        %v960 = vpop.f32.mrf.mxu0
        %v961 = vadd.f32 %v869, %v960
        %962 = vmatmul.f32.gmra.mxu0 %v844
        %v963 = vpop.f32.mrf.mxu0
        %v964 = vadd.f32 %v869, %v963
        %965 = vmatmul.f32.gmra.mxu0 %v845
        %v966 = vpop.f32.mrf.mxu0
        %v967 = vadd.f32 %v869, %v966
        %968 = vmatmul.f32.gmra.mxu0 %v846
        %v969 = vpop.f32.mrf.mxu0
        %v970 = vadd.f32 %v869, %v969
        %971 = vmatmul.f32.gmra.mxu0 %v847
        %v972 = vpop.f32.mrf.mxu0
        %v973 = vadd.f32 %v869, %v972
        %974 = vmatmul.f32.gmra.mxu0 %v848
        %v975 = vpop.f32.mrf.mxu0
        %v976 = vadd.f32 %v869, %v975
        %977 = vmatmul.f32.gmra.mxu0 %v849
        %v978 = vpop.f32.mrf.mxu0
        %v979 = vadd.f32 %v869, %v978
        %980 = vmatmul.f32.gmra.mxu0 %v850
        %v981 = vpop.f32.mrf.mxu0
        %v982 = vadd.f32 %v869, %v981
        %983 = vdwg.mxu0
        %v984 = vmax.f32 %v889, 0.0
        %v985 = vmax.f32 %v892, 0.0
        %v986 = vmax.f32 %v895, 0.0
        %v987 = vmax.f32 %v898, 0.0
        %v988 = vmax.f32 %v901, 0.0
        %v989 = vmax.f32 %v904, 0.0
        %v990 = vmax.f32 %v907, 0.0
        %v991 = vmax.f32 %v910, 0.0
        %v992 = vmax.f32 %v913, 0.0
        %v993 = vmax.f32 %v916, 0.0
        %v994 = vmax.f32 %v919, 0.0
        %v995 = vmax.f32 %v922, 0.0
        %v996 = vmax.f32 %v925, 0.0
        %v997 = vmax.f32 %v928, 0.0
        %v998 = vmax.f32 %v931, 0.0
        %v999 = vmax.f32 %v934, 0.0
        %v1000 = vmax.f32 %v937, 0.0
        %v1001 = vmax.f32 %v940, 0.0
        %v1002 = vmax.f32 %v943, 0.0
        %v1003 = vmax.f32 %v946, 0.0
        %v1004 = vmax.f32 %v949, 0.0
        %v1005 = vmax.f32 %v952, 0.0
        %v1006 = vmax.f32 %v955, 0.0
        %v1007 = vmax.f32 %v958, 0.0
        %v1008 = vmax.f32 %v961, 0.0
        %v1009 = vmax.f32 %v964, 0.0
        %v1010 = vmax.f32 %v967, 0.0
        %v1011 = vmax.f32 %v970, 0.0
        %v1012 = vmax.f32 %v973, 0.0
        %v1013 = vmax.f32 %v976, 0.0
        %v1014 = vmax.f32 %v979, 0.0
        %v1015 = vmax.f32 %v982, 0.0
        %v1016 = vld [vmem:[#allocation8] sm:$0xff]
        %v1017 = vld [vmem:[#allocation8 + $0x8] sm:$0xff]
        %v1018 = vld [vmem:[#allocation8 + $0x10] sm:$0xff]
        %v1019 = vld [vmem:[#allocation8 + $0x18] sm:$0xff]
        %v1020 = vld [vmem:[#allocation8 + $0x20] sm:$0xff]
        %v1021 = vld [vmem:[#allocation8 + $0x28] sm:$0xff]
        %v1022 = vld [vmem:[#allocation8 + $0x30] sm:$0xff]
        %v1023 = vld [vmem:[#allocation8 + $0x38] sm:$0xff]
        %v1024 = vld [vmem:[#allocation8 + $0x40] sm:$0xff]
        %v1025 = vld [vmem:[#allocation8 + $0x48] sm:$0xff]
        %v1026 = vld [vmem:[#allocation8 + $0x50] sm:$0xff]
        %v1027 = vld [vmem:[#allocation8 + $0x58] sm:$0xff]
        %v1028 = vld [vmem:[#allocation8 + $0x60] sm:$0xff]
        %v1029 = vld [vmem:[#allocation8 + $0x68] sm:$0xff]
        %v1030 = vld [vmem:[#allocation8 + $0x70] sm:$0xff]
        %v1031 = vld [vmem:[#allocation8 + $0x78] sm:$0xff]
        %v1032 = vld [vmem:[#allocation10] sm:$0x1]
        %v1034 = vperm.slane %v1032, 0
        %1036 = vmatpush.msra.mxu0 %v1031
        %1037 = vmatpush.msra.mxu0 %v1030
        %1038 = vmatpush.msra.mxu0 %v1029
        %1039 = vmatpush.msra.mxu0 %v1028
        %1040 = vmatpush.msra.mxu0 %v1027
        %1041 = vmatpush.msra.mxu0 %v1026
        %1042 = vmatpush.msra.mxu0 %v1025
        %1043 = vmatpush.msra.mxu0 %v1024
        %1044 = vmatpush.msra.mxu0 %v1023
        %1045 = vmatpush.msra.mxu0 %v1022
        %1046 = vmatpush.msra.mxu0 %v1021
        %1047 = vmatpush.msra.mxu0 %v1020
        %1048 = vmatpush.msra.mxu0 %v1019
        %1049 = vmatpush.msra.mxu0 %v1018
        %1050 = vmatpush.msra.mxu0 %v1017
        %1051 = vmatpush.msra.mxu0 %v1016
        %1052 = vmatmul.f32.gmra.mxu0 %v984
        %v1053 = vpop.f32.mrf.mxu0
        %v1054 = vadd.f32 %v1034, %v1053
        %1055 = vmatmul.f32.gmra.mxu0 %v985
        %v1056 = vpop.f32.mrf.mxu0
        %v1057 = vadd.f32 %v1034, %v1056
        %1058 = vmatmul.f32.gmra.mxu0 %v986
        %v1059 = vpop.f32.mrf.mxu0
        %v1060 = vadd.f32 %v1034, %v1059
        %1061 = vmatmul.f32.gmra.mxu0 %v987
        %v1062 = vpop.f32.mrf.mxu0
        %v1063 = vadd.f32 %v1034, %v1062
        %1064 = vmatmul.f32.gmra.mxu0 %v988
        %v1065 = vpop.f32.mrf.mxu0
        %v1066 = vadd.f32 %v1034, %v1065
        %1067 = vmatmul.f32.gmra.mxu0 %v989
        %v1068 = vpop.f32.mrf.mxu0
        %v1069 = vadd.f32 %v1034, %v1068
        %1070 = vmatmul.f32.gmra.mxu0 %v990
        %v1071 = vpop.f32.mrf.mxu0
        %v1072 = vadd.f32 %v1034, %v1071
        %1073 = vmatmul.f32.gmra.mxu0 %v991
        %v1074 = vpop.f32.mrf.mxu0
        %v1075 = vadd.f32 %v1034, %v1074
        %1076 = vmatmul.f32.gmra.mxu0 %v992
        %v1077 = vpop.f32.mrf.mxu0
        %v1078 = vadd.f32 %v1034, %v1077
        %1079 = vmatmul.f32.gmra.mxu0 %v993
        %v1080 = vpop.f32.mrf.mxu0
        %v1081 = vadd.f32 %v1034, %v1080
        %1082 = vmatmul.f32.gmra.mxu0 %v994
        %v1083 = vpop.f32.mrf.mxu0
        %v1084 = vadd.f32 %v1034, %v1083
        %1085 = vmatmul.f32.gmra.mxu0 %v995
        %v1086 = vpop.f32.mrf.mxu0
        %v1087 = vadd.f32 %v1034, %v1086
        %1088 = vmatmul.f32.gmra.mxu0 %v996
        %v1089 = vpop.f32.mrf.mxu0
        %v1090 = vadd.f32 %v1034, %v1089
        %1091 = vmatmul.f32.gmra.mxu0 %v997
        %v1092 = vpop.f32.mrf.mxu0
        %v1093 = vadd.f32 %v1034, %v1092
        %1094 = vmatmul.f32.gmra.mxu0 %v998
        %v1095 = vpop.f32.mrf.mxu0
        %v1096 = vadd.f32 %v1034, %v1095
        %1097 = vmatmul.f32.gmra.mxu0 %v999
        %v1098 = vpop.f32.mrf.mxu0
        %v1099 = vadd.f32 %v1034, %v1098
        %1100 = vmatmul.f32.gmra.mxu0 %v1000
        %v1101 = vpop.f32.mrf.mxu0
        %v1102 = vadd.f32 %v1034, %v1101
        %1103 = vmatmul.f32.gmra.mxu0 %v1001
        %v1104 = vpop.f32.mrf.mxu0
        %v1105 = vadd.f32 %v1034, %v1104
        %1106 = vmatmul.f32.gmra.mxu0 %v1002
        %v1107 = vpop.f32.mrf.mxu0
        %v1108 = vadd.f32 %v1034, %v1107
        %1109 = vmatmul.f32.gmra.mxu0 %v1003
        %v1110 = vpop.f32.mrf.mxu0
        %v1111 = vadd.f32 %v1034, %v1110
        %1112 = vmatmul.f32.gmra.mxu0 %v1004
        %v1113 = vpop.f32.mrf.mxu0
        %v1114 = vadd.f32 %v1034, %v1113
        %1115 = vmatmul.f32.gmra.mxu0 %v1005
        %v1116 = vpop.f32.mrf.mxu0
        %v1117 = vadd.f32 %v1034, %v1116
        %1118 = vmatmul.f32.gmra.mxu0 %v1006
        %v1119 = vpop.f32.mrf.mxu0
        %v1120 = vadd.f32 %v1034, %v1119
        %1121 = vmatmul.f32.gmra.mxu0 %v1007
        %v1122 = vpop.f32.mrf.mxu0
        %v1123 = vadd.f32 %v1034, %v1122
        %1124 = vmatmul.f32.gmra.mxu0 %v1008
        %v1125 = vpop.f32.mrf.mxu0
        %v1126 = vadd.f32 %v1034, %v1125
        %1127 = vmatmul.f32.gmra.mxu0 %v1009
        %v1128 = vpop.f32.mrf.mxu0
        %v1129 = vadd.f32 %v1034, %v1128
        %1130 = vmatmul.f32.gmra.mxu0 %v1010
        %v1131 = vpop.f32.mrf.mxu0
        %v1132 = vadd.f32 %v1034, %v1131
        %1133 = vmatmul.f32.gmra.mxu0 %v1011
        %v1134 = vpop.f32.mrf.mxu0
        %v1135 = vadd.f32 %v1034, %v1134
        %1136 = vmatmul.f32.gmra.mxu0 %v1012
        %v1137 = vpop.f32.mrf.mxu0
        %v1138 = vadd.f32 %v1034, %v1137
        %1139 = vmatmul.f32.gmra.mxu0 %v1013
        %v1140 = vpop.f32.mrf.mxu0
        %v1141 = vadd.f32 %v1034, %v1140
        %1142 = vmatmul.f32.gmra.mxu0 %v1014
        %v1143 = vpop.f32.mrf.mxu0
        %v1144 = vadd.f32 %v1034, %v1143
        %1145 = vmatmul.f32.gmra.mxu0 %v1015
        %v1146 = vpop.f32.mrf.mxu0
        %v1147 = vadd.f32 %v1034, %v1146
        %1148 = vdwg.mxu0
        %v1149 = vmax.f32 %v1054, 0.0
        %v1150 = vmax.f32 %v1057, 0.0
        %v1151 = vmax.f32 %v1060, 0.0
        %v1152 = vmax.f32 %v1063, 0.0
        %v1153 = vmax.f32 %v1066, 0.0
        %v1154 = vmax.f32 %v1069, 0.0
        %v1155 = vmax.f32 %v1072, 0.0
        %v1156 = vmax.f32 %v1075, 0.0
        %v1157 = vmax.f32 %v1078, 0.0
        %v1158 = vmax.f32 %v1081, 0.0
        %v1159 = vmax.f32 %v1084, 0.0
        %v1160 = vmax.f32 %v1087, 0.0
        %v1161 = vmax.f32 %v1090, 0.0
        %v1162 = vmax.f32 %v1093, 0.0
        %v1163 = vmax.f32 %v1096, 0.0
        %v1164 = vmax.f32 %v1099, 0.0
        %v1165 = vmax.f32 %v1102, 0.0
        %v1166 = vmax.f32 %v1105, 0.0
        %v1167 = vmax.f32 %v1108, 0.0
        %v1168 = vmax.f32 %v1111, 0.0
        %v1169 = vmax.f32 %v1114, 0.0
        %v1170 = vmax.f32 %v1117, 0.0
        %v1171 = vmax.f32 %v1120, 0.0
        %v1172 = vmax.f32 %v1123, 0.0
        %v1173 = vmax.f32 %v1126, 0.0
        %v1174 = vmax.f32 %v1129, 0.0
        %v1175 = vmax.f32 %v1132, 0.0
        %v1176 = vmax.f32 %v1135, 0.0
        %v1177 = vmax.f32 %v1138, 0.0
        %v1178 = vmax.f32 %v1141, 0.0
        %v1179 = vmax.f32 %v1144, 0.0
        %v1180 = vmax.f32 %v1147, 0.0
        %v1181 = vld [vmem:[#allocation11] sm:$0xff]
        %v1182 = vld [vmem:[#allocation11 + $0x8] sm:$0xff]
        %v1183 = vld [vmem:[#allocation11 + $0x10] sm:$0xff]
        %v1184 = vld [vmem:[#allocation11 + $0x18] sm:$0xff]
        %v1185 = vld [vmem:[#allocation11 + $0x20] sm:$0xff]
        %v1186 = vld [vmem:[#allocation11 + $0x28] sm:$0xff]
        %v1187 = vld [vmem:[#allocation11 + $0x30] sm:$0xff]
        %v1188 = vld [vmem:[#allocation11 + $0x38] sm:$0xff]
        %v1189 = vld [vmem:[#allocation11 + $0x40] sm:$0xff]
        %v1190 = vld [vmem:[#allocation11 + $0x48] sm:$0xff]
        %v1191 = vld [vmem:[#allocation11 + $0x50] sm:$0xff]
        %v1192 = vld [vmem:[#allocation11 + $0x58] sm:$0xff]
        %v1193 = vld [vmem:[#allocation11 + $0x60] sm:$0xff]
        %v1194 = vld [vmem:[#allocation11 + $0x68] sm:$0xff]
        %v1195 = vld [vmem:[#allocation11 + $0x70] sm:$0xff]
        %v1196 = vld [vmem:[#allocation11 + $0x78] sm:$0xff]
        %v1197 = vld [vmem:[#allocation13] sm:$0x1]
        %v1199 = vperm.slane %v1197, 0
        %1201 = vmatpush.msra.mxu0 %v1196
        %1202 = vmatpush.msra.mxu0 %v1195
        %1203 = vmatpush.msra.mxu0 %v1194
        %1204 = vmatpush.msra.mxu0 %v1193
        %1205 = vmatpush.msra.mxu0 %v1192
        %1206 = vmatpush.msra.mxu0 %v1191
        %1207 = vmatpush.msra.mxu0 %v1190
        %1208 = vmatpush.msra.mxu0 %v1189
        %1209 = vmatpush.msra.mxu0 %v1188
        %1210 = vmatpush.msra.mxu0 %v1187
        %1211 = vmatpush.msra.mxu0 %v1186
        %1212 = vmatpush.msra.mxu0 %v1185
        %1213 = vmatpush.msra.mxu0 %v1184
        %1214 = vmatpush.msra.mxu0 %v1183
        %1215 = vmatpush.msra.mxu0 %v1182
        %1216 = vmatpush.msra.mxu0 %v1181
        %1217 = vmatmul.f32.gmra.mxu0 %v1149
        %v1218 = vpop.f32.mrf.mxu0
        %v1219 = vadd.f32 %v1199, %v1218
        %1220 = vmatmul.f32.gmra.mxu0 %v1150
        %v1221 = vpop.f32.mrf.mxu0
        %v1222 = vadd.f32 %v1199, %v1221
        %1223 = vmatmul.f32.gmra.mxu0 %v1151
        %v1224 = vpop.f32.mrf.mxu0
        %v1225 = vadd.f32 %v1199, %v1224
        %1226 = vmatmul.f32.gmra.mxu0 %v1152
        %v1227 = vpop.f32.mrf.mxu0
        %v1228 = vadd.f32 %v1199, %v1227
        %1229 = vmatmul.f32.gmra.mxu0 %v1153
        %v1230 = vpop.f32.mrf.mxu0
        %v1231 = vadd.f32 %v1199, %v1230
        %1232 = vmatmul.f32.gmra.mxu0 %v1154
        %v1233 = vpop.f32.mrf.mxu0
        %v1234 = vadd.f32 %v1199, %v1233
        %1235 = vmatmul.f32.gmra.mxu0 %v1155
        %v1236 = vpop.f32.mrf.mxu0
        %v1237 = vadd.f32 %v1199, %v1236
        %1238 = vmatmul.f32.gmra.mxu0 %v1156
        %v1239 = vpop.f32.mrf.mxu0
        %v1240 = vadd.f32 %v1199, %v1239
        %1241 = vmatmul.f32.gmra.mxu0 %v1157
        %v1242 = vpop.f32.mrf.mxu0
        %v1243 = vadd.f32 %v1199, %v1242
        %1244 = vmatmul.f32.gmra.mxu0 %v1158
        %v1245 = vpop.f32.mrf.mxu0
        %v1246 = vadd.f32 %v1199, %v1245
        %1247 = vmatmul.f32.gmra.mxu0 %v1159
        %v1248 = vpop.f32.mrf.mxu0
        %v1249 = vadd.f32 %v1199, %v1248
        %1250 = vmatmul.f32.gmra.mxu0 %v1160
        %v1251 = vpop.f32.mrf.mxu0
        %v1252 = vadd.f32 %v1199, %v1251
        %1253 = vmatmul.f32.gmra.mxu0 %v1161
        %v1254 = vpop.f32.mrf.mxu0
        %v1255 = vadd.f32 %v1199, %v1254
        %1256 = vmatmul.f32.gmra.mxu0 %v1162
        %v1257 = vpop.f32.mrf.mxu0
        %v1258 = vadd.f32 %v1199, %v1257
        %1259 = vmatmul.f32.gmra.mxu0 %v1163
        %v1260 = vpop.f32.mrf.mxu0
        %v1261 = vadd.f32 %v1199, %v1260
        %1262 = vmatmul.f32.gmra.mxu0 %v1164
        %v1263 = vpop.f32.mrf.mxu0
        %v1264 = vadd.f32 %v1199, %v1263
        %1265 = vmatmul.f32.gmra.mxu0 %v1165
        %v1266 = vpop.f32.mrf.mxu0
        %v1267 = vadd.f32 %v1199, %v1266
        %1268 = vmatmul.f32.gmra.mxu0 %v1166
        %v1269 = vpop.f32.mrf.mxu0
        %v1270 = vadd.f32 %v1199, %v1269
        %1271 = vmatmul.f32.gmra.mxu0 %v1167
        %v1272 = vpop.f32.mrf.mxu0
        %v1273 = vadd.f32 %v1199, %v1272
        %1274 = vmatmul.f32.gmra.mxu0 %v1168
        %v1275 = vpop.f32.mrf.mxu0
        %v1276 = vadd.f32 %v1199, %v1275
        %1277 = vmatmul.f32.gmra.mxu0 %v1169
        %v1278 = vpop.f32.mrf.mxu0
        %v1279 = vadd.f32 %v1199, %v1278
        %1280 = vmatmul.f32.gmra.mxu0 %v1170
        %v1281 = vpop.f32.mrf.mxu0
        %v1282 = vadd.f32 %v1199, %v1281
        %1283 = vmatmul.f32.gmra.mxu0 %v1171
        %v1284 = vpop.f32.mrf.mxu0
        %v1285 = vadd.f32 %v1199, %v1284
        %1286 = vmatmul.f32.gmra.mxu0 %v1172
        %v1287 = vpop.f32.mrf.mxu0
        %v1288 = vadd.f32 %v1199, %v1287
        %1289 = vmatmul.f32.gmra.mxu0 %v1173
        %v1290 = vpop.f32.mrf.mxu0
        %v1291 = vadd.f32 %v1199, %v1290
        %1292 = vmatmul.f32.gmra.mxu0 %v1174
        %v1293 = vpop.f32.mrf.mxu0
        %v1294 = vadd.f32 %v1199, %v1293
        %1295 = vmatmul.f32.gmra.mxu0 %v1175
        %v1296 = vpop.f32.mrf.mxu0
        %v1297 = vadd.f32 %v1199, %v1296
        %1298 = vmatmul.f32.gmra.mxu0 %v1176
        %v1299 = vpop.f32.mrf.mxu0
        %v1300 = vadd.f32 %v1199, %v1299
        %1301 = vmatmul.f32.gmra.mxu0 %v1177
        %v1302 = vpop.f32.mrf.mxu0
        %v1303 = vadd.f32 %v1199, %v1302
        %1304 = vmatmul.f32.gmra.mxu0 %v1178
        %v1305 = vpop.f32.mrf.mxu0
        %v1306 = vadd.f32 %v1199, %v1305
        %1307 = vmatmul.f32.gmra.mxu0 %v1179
        %v1308 = vpop.f32.mrf.mxu0
        %v1309 = vadd.f32 %v1199, %v1308
        %1310 = vmatmul.f32.gmra.mxu0 %v1180
        %v1311 = vpop.f32.mrf.mxu0
        %v1312 = vadd.f32 %v1199, %v1311
        %1313 = vdwg.mxu0
        %v1314 = vmax.f32 %v1219, 0.0
        %v1315 = vmax.f32 %v1222, 0.0
        %v1316 = vmax.f32 %v1225, 0.0
        %v1317 = vmax.f32 %v1228, 0.0
        %v1318 = vmax.f32 %v1231, 0.0
        %v1319 = vmax.f32 %v1234, 0.0
        %v1320 = vmax.f32 %v1237, 0.0
        %v1321 = vmax.f32 %v1240, 0.0
        %v1322 = vmax.f32 %v1243, 0.0
        %v1323 = vmax.f32 %v1246, 0.0
        %v1324 = vmax.f32 %v1249, 0.0
        %v1325 = vmax.f32 %v1252, 0.0
        %v1326 = vmax.f32 %v1255, 0.0
        %v1327 = vmax.f32 %v1258, 0.0
        %v1328 = vmax.f32 %v1261, 0.0
        %v1329 = vmax.f32 %v1264, 0.0
        %v1330 = vmax.f32 %v1267, 0.0
        %v1331 = vmax.f32 %v1270, 0.0
        %v1332 = vmax.f32 %v1273, 0.0
        %v1333 = vmax.f32 %v1276, 0.0
        %v1334 = vmax.f32 %v1279, 0.0
        %v1335 = vmax.f32 %v1282, 0.0
        %v1336 = vmax.f32 %v1285, 0.0
        %v1337 = vmax.f32 %v1288, 0.0
        %v1338 = vmax.f32 %v1291, 0.0
        %v1339 = vmax.f32 %v1294, 0.0
        %v1340 = vmax.f32 %v1297, 0.0
        %v1341 = vmax.f32 %v1300, 0.0
        %v1342 = vmax.f32 %v1303, 0.0
        %v1343 = vmax.f32 %v1306, 0.0
        %v1344 = vmax.f32 %v1309, 0.0
        %v1345 = vmax.f32 %v1312, 0.0
        %v1346 = vld [vmem:[#allocation14] sm:$0xff]
        %v1347 = vld [vmem:[#allocation14 + $0x8] sm:$0xff]
        %v1348 = vld [vmem:[#allocation14 + $0x10] sm:$0xff]
        %v1349 = vld [vmem:[#allocation14 + $0x18] sm:$0xff]
        %v1350 = vld [vmem:[#allocation14 + $0x20] sm:$0xff]
        %v1351 = vld [vmem:[#allocation14 + $0x28] sm:$0xff]
        %v1352 = vld [vmem:[#allocation14 + $0x30] sm:$0xff]
        %v1353 = vld [vmem:[#allocation14 + $0x38] sm:$0xff]
        %v1354 = vld [vmem:[#allocation14 + $0x40] sm:$0xff]
        %v1355 = vld [vmem:[#allocation14 + $0x48] sm:$0xff]
        %v1356 = vld [vmem:[#allocation14 + $0x50] sm:$0xff]
        %v1357 = vld [vmem:[#allocation14 + $0x58] sm:$0xff]
        %v1358 = vld [vmem:[#allocation14 + $0x60] sm:$0xff]
        %v1359 = vld [vmem:[#allocation14 + $0x68] sm:$0xff]
        %v1360 = vld [vmem:[#allocation14 + $0x70] sm:$0xff]
        %v1361 = vld [vmem:[#allocation14 + $0x78] sm:$0xff]
        %v1362 = vld [vmem:[#allocation16] sm:$0x1]
        %v1364 = vperm.slane %v1362, 0
        %1366 = vmatpush.msra.mxu0 %v1361
        %1367 = vmatpush.msra.mxu0 %v1360
        %1368 = vmatpush.msra.mxu0 %v1359
        %1369 = vmatpush.msra.mxu0 %v1358
        %1370 = vmatpush.msra.mxu0 %v1357
        %1371 = vmatpush.msra.mxu0 %v1356
        %1372 = vmatpush.msra.mxu0 %v1355
        %1373 = vmatpush.msra.mxu0 %v1354
        %1374 = vmatpush.msra.mxu0 %v1353
        %1375 = vmatpush.msra.mxu0 %v1352
        %1376 = vmatpush.msra.mxu0 %v1351
        %1377 = vmatpush.msra.mxu0 %v1350
        %1378 = vmatpush.msra.mxu0 %v1349
        %1379 = vmatpush.msra.mxu0 %v1348
        %1380 = vmatpush.msra.mxu0 %v1347
        %1381 = vmatpush.msra.mxu0 %v1346
        %1382 = vmatmul.f32.gmra.mxu0 %v1314
        %v1383 = vpop.f32.mrf.mxu0
        %v1384 = vadd.f32 %v1364, %v1383
        %1385 = vmatmul.f32.gmra.mxu0 %v1315
        %v1386 = vpop.f32.mrf.mxu0
        %v1387 = vadd.f32 %v1364, %v1386
        %1388 = vmatmul.f32.gmra.mxu0 %v1316
        %v1389 = vpop.f32.mrf.mxu0
        %v1390 = vadd.f32 %v1364, %v1389
        %1391 = vmatmul.f32.gmra.mxu0 %v1317
        %v1392 = vpop.f32.mrf.mxu0
        %v1393 = vadd.f32 %v1364, %v1392
        %1394 = vmatmul.f32.gmra.mxu0 %v1318
        %v1395 = vpop.f32.mrf.mxu0
        %v1396 = vadd.f32 %v1364, %v1395
        %1397 = vmatmul.f32.gmra.mxu0 %v1319
        %v1398 = vpop.f32.mrf.mxu0
        %v1399 = vadd.f32 %v1364, %v1398
        %1400 = vmatmul.f32.gmra.mxu0 %v1320
        %v1401 = vpop.f32.mrf.mxu0
        %v1402 = vadd.f32 %v1364, %v1401
        %1403 = vmatmul.f32.gmra.mxu0 %v1321
        %v1404 = vpop.f32.mrf.mxu0
        %v1405 = vadd.f32 %v1364, %v1404
        %1406 = vmatmul.f32.gmra.mxu0 %v1322
        %v1407 = vpop.f32.mrf.mxu0
        %v1408 = vadd.f32 %v1364, %v1407
        %1409 = vmatmul.f32.gmra.mxu0 %v1323
        %v1410 = vpop.f32.mrf.mxu0
        %v1411 = vadd.f32 %v1364, %v1410
        %1412 = vmatmul.f32.gmra.mxu0 %v1324
        %v1413 = vpop.f32.mrf.mxu0
        %v1414 = vadd.f32 %v1364, %v1413
        %1415 = vmatmul.f32.gmra.mxu0 %v1325
        %v1416 = vpop.f32.mrf.mxu0
        %v1417 = vadd.f32 %v1364, %v1416
        %1418 = vmatmul.f32.gmra.mxu0 %v1326
        %v1419 = vpop.f32.mrf.mxu0
        %v1420 = vadd.f32 %v1364, %v1419
        %1421 = vmatmul.f32.gmra.mxu0 %v1327
        %v1422 = vpop.f32.mrf.mxu0
        %v1423 = vadd.f32 %v1364, %v1422
        %1424 = vmatmul.f32.gmra.mxu0 %v1328
        %v1425 = vpop.f32.mrf.mxu0
        %v1426 = vadd.f32 %v1364, %v1425
        %1427 = vmatmul.f32.gmra.mxu0 %v1329
        %v1428 = vpop.f32.mrf.mxu0
        %v1429 = vadd.f32 %v1364, %v1428
        %1430 = vmatmul.f32.gmra.mxu0 %v1330
        %v1431 = vpop.f32.mrf.mxu0
        %v1432 = vadd.f32 %v1364, %v1431
        %1433 = vmatmul.f32.gmra.mxu0 %v1331
        %v1434 = vpop.f32.mrf.mxu0
        %v1435 = vadd.f32 %v1364, %v1434
        %1436 = vmatmul.f32.gmra.mxu0 %v1332
        %v1437 = vpop.f32.mrf.mxu0
        %v1438 = vadd.f32 %v1364, %v1437
        %1439 = vmatmul.f32.gmra.mxu0 %v1333
        %v1440 = vpop.f32.mrf.mxu0
        %v1441 = vadd.f32 %v1364, %v1440
        %1442 = vmatmul.f32.gmra.mxu0 %v1334
        %v1443 = vpop.f32.mrf.mxu0
        %v1444 = vadd.f32 %v1364, %v1443
        %1445 = vmatmul.f32.gmra.mxu0 %v1335
        %v1446 = vpop.f32.mrf.mxu0
        %v1447 = vadd.f32 %v1364, %v1446
        %1448 = vmatmul.f32.gmra.mxu0 %v1336
        %v1449 = vpop.f32.mrf.mxu0
        %v1450 = vadd.f32 %v1364, %v1449
        %1451 = vmatmul.f32.gmra.mxu0 %v1337
        %v1452 = vpop.f32.mrf.mxu0
        %v1453 = vadd.f32 %v1364, %v1452
        %1454 = vmatmul.f32.gmra.mxu0 %v1338
        %v1455 = vpop.f32.mrf.mxu0
        %v1456 = vadd.f32 %v1364, %v1455
        %1457 = vmatmul.f32.gmra.mxu0 %v1339
        %v1458 = vpop.f32.mrf.mxu0
        %v1459 = vadd.f32 %v1364, %v1458
        %1460 = vmatmul.f32.gmra.mxu0 %v1340
        %v1461 = vpop.f32.mrf.mxu0
        %v1462 = vadd.f32 %v1364, %v1461
        %1463 = vmatmul.f32.gmra.mxu0 %v1341
        %v1464 = vpop.f32.mrf.mxu0
        %v1465 = vadd.f32 %v1364, %v1464
        %1466 = vmatmul.f32.gmra.mxu0 %v1342
        %v1467 = vpop.f32.mrf.mxu0
        %v1468 = vadd.f32 %v1364, %v1467
        %1469 = vmatmul.f32.gmra.mxu0 %v1343
        %v1470 = vpop.f32.mrf.mxu0
        %v1471 = vadd.f32 %v1364, %v1470
        %1472 = vmatmul.f32.gmra.mxu0 %v1344
        %v1473 = vpop.f32.mrf.mxu0
        %v1474 = vadd.f32 %v1364, %v1473
        %1475 = vmatmul.f32.gmra.mxu0 %v1345
        %v1476 = vpop.f32.mrf.mxu0
        %v1477 = vadd.f32 %v1364, %v1476
        %1478 = vdwg.mxu0
        %v1479 = vld [vmem:[#allocation17] sm:$0xff]
        %v1480 = vld [vmem:[#allocation17 + $0x8] sm:$0xff]
        %v1481 = vld [vmem:[#allocation17 + $0x10] sm:$0xff]
        %v1482 = vld [vmem:[#allocation17 + $0x18] sm:$0xff]
        %v1483 = vld [vmem:[#allocation17 + $0x20] sm:$0xff]
        %v1484 = vld [vmem:[#allocation17 + $0x28] sm:$0xff]
        %v1485 = vld [vmem:[#allocation17 + $0x30] sm:$0xff]
        %v1486 = vld [vmem:[#allocation17 + $0x38] sm:$0xff]
        %v1487 = vld [vmem:[#allocation17 + $0x40] sm:$0xff]
        %v1488 = vld [vmem:[#allocation17 + $0x48] sm:$0xff]
        %v1489 = vld [vmem:[#allocation17 + $0x50] sm:$0xff]
        %v1490 = vld [vmem:[#allocation17 + $0x58] sm:$0xff]
        %v1491 = vld [vmem:[#allocation17 + $0x60] sm:$0xff]
        %v1492 = vld [vmem:[#allocation17 + $0x68] sm:$0xff]
        %v1493 = vld [vmem:[#allocation17 + $0x70] sm:$0xff]
        %v1494 = vld [vmem:[#allocation17 + $0x78] sm:$0xff]
        %v1495 = vld [vmem:[#allocation19] sm:$0x1]
        %v1497 = vperm.slane %v1495, 0
        %1499 = vmatpush.msra.mxu0 %v1494
        %1500 = vmatpush.msra.mxu0 %v1493
        %1501 = vmatpush.msra.mxu0 %v1492
        %1502 = vmatpush.msra.mxu0 %v1491
        %1503 = vmatpush.msra.mxu0 %v1490
        %1504 = vmatpush.msra.mxu0 %v1489
        %1505 = vmatpush.msra.mxu0 %v1488
        %1506 = vmatpush.msra.mxu0 %v1487
        %1507 = vmatpush.msra.mxu0 %v1486
        %1508 = vmatpush.msra.mxu0 %v1485
        %1509 = vmatpush.msra.mxu0 %v1484
        %1510 = vmatpush.msra.mxu0 %v1483
        %1511 = vmatpush.msra.mxu0 %v1482
        %1512 = vmatpush.msra.mxu0 %v1481
        %1513 = vmatpush.msra.mxu0 %v1480
        %1514 = vmatpush.msra.mxu0 %v1479
        %1515 = vmatmul.f32.gmra.mxu0 %v1384
        %v1516 = vpop.f32.mrf.mxu0
        %v1517 = vadd.f32 %v1497, %v1516
        %1518 = vmatmul.f32.gmra.mxu0 %v1387
        %v1519 = vpop.f32.mrf.mxu0
        %v1520 = vadd.f32 %v1497, %v1519
        %1521 = vmatmul.f32.gmra.mxu0 %v1390
        %v1522 = vpop.f32.mrf.mxu0
        %v1523 = vadd.f32 %v1497, %v1522
        %1524 = vmatmul.f32.gmra.mxu0 %v1393
        %v1525 = vpop.f32.mrf.mxu0
        %v1526 = vadd.f32 %v1497, %v1525
        %1527 = vmatmul.f32.gmra.mxu0 %v1396
        %v1528 = vpop.f32.mrf.mxu0
        %v1529 = vadd.f32 %v1497, %v1528
        %1530 = vmatmul.f32.gmra.mxu0 %v1399
        %v1531 = vpop.f32.mrf.mxu0
        %v1532 = vadd.f32 %v1497, %v1531
        %1533 = vmatmul.f32.gmra.mxu0 %v1402
        %v1534 = vpop.f32.mrf.mxu0
        %v1535 = vadd.f32 %v1497, %v1534
        %1536 = vmatmul.f32.gmra.mxu0 %v1405
        %v1537 = vpop.f32.mrf.mxu0
        %v1538 = vadd.f32 %v1497, %v1537
        %1539 = vmatmul.f32.gmra.mxu0 %v1408
        %v1540 = vpop.f32.mrf.mxu0
        %v1541 = vadd.f32 %v1497, %v1540
        %1542 = vmatmul.f32.gmra.mxu0 %v1411
        %v1543 = vpop.f32.mrf.mxu0
        %v1544 = vadd.f32 %v1497, %v1543
        %1545 = vmatmul.f32.gmra.mxu0 %v1414
        %v1546 = vpop.f32.mrf.mxu0
        %v1547 = vadd.f32 %v1497, %v1546
        %1548 = vmatmul.f32.gmra.mxu0 %v1417
        %v1549 = vpop.f32.mrf.mxu0
        %v1550 = vadd.f32 %v1497, %v1549
        %1551 = vmatmul.f32.gmra.mxu0 %v1420
        %v1552 = vpop.f32.mrf.mxu0
        %v1553 = vadd.f32 %v1497, %v1552
        %1554 = vmatmul.f32.gmra.mxu0 %v1423
        %v1555 = vpop.f32.mrf.mxu0
        %v1556 = vadd.f32 %v1497, %v1555
        %1557 = vmatmul.f32.gmra.mxu0 %v1426
        %v1558 = vpop.f32.mrf.mxu0
        %v1559 = vadd.f32 %v1497, %v1558
        %1560 = vmatmul.f32.gmra.mxu0 %v1429
        %v1561 = vpop.f32.mrf.mxu0
        %v1562 = vadd.f32 %v1497, %v1561
        %1563 = vmatmul.f32.gmra.mxu0 %v1432
        %v1564 = vpop.f32.mrf.mxu0
        %v1565 = vadd.f32 %v1497, %v1564
        %1566 = vmatmul.f32.gmra.mxu0 %v1435
        %v1567 = vpop.f32.mrf.mxu0
        %v1568 = vadd.f32 %v1497, %v1567
        %1569 = vmatmul.f32.gmra.mxu0 %v1438
        %v1570 = vpop.f32.mrf.mxu0
        %v1571 = vadd.f32 %v1497, %v1570
        %1572 = vmatmul.f32.gmra.mxu0 %v1441
        %v1573 = vpop.f32.mrf.mxu0
        %v1574 = vadd.f32 %v1497, %v1573
        %1575 = vmatmul.f32.gmra.mxu0 %v1444
        %v1576 = vpop.f32.mrf.mxu0
        %v1577 = vadd.f32 %v1497, %v1576
        %1578 = vmatmul.f32.gmra.mxu0 %v1447
        %v1579 = vpop.f32.mrf.mxu0
        %v1580 = vadd.f32 %v1497, %v1579
        %1581 = vmatmul.f32.gmra.mxu0 %v1450
        %v1582 = vpop.f32.mrf.mxu0
        %v1583 = vadd.f32 %v1497, %v1582
        %1584 = vmatmul.f32.gmra.mxu0 %v1453
        %v1585 = vpop.f32.mrf.mxu0
        %v1586 = vadd.f32 %v1497, %v1585
        %1587 = vmatmul.f32.gmra.mxu0 %v1456
        %v1588 = vpop.f32.mrf.mxu0
        %v1589 = vadd.f32 %v1497, %v1588
        %1590 = vmatmul.f32.gmra.mxu0 %v1459
        %v1591 = vpop.f32.mrf.mxu0
        %v1592 = vadd.f32 %v1497, %v1591
        %1593 = vmatmul.f32.gmra.mxu0 %v1462
        %v1594 = vpop.f32.mrf.mxu0
        %v1595 = vadd.f32 %v1497, %v1594
        %1596 = vmatmul.f32.gmra.mxu0 %v1465
        %v1597 = vpop.f32.mrf.mxu0
        %v1598 = vadd.f32 %v1497, %v1597
        %1599 = vmatmul.f32.gmra.mxu0 %v1468
        %v1600 = vpop.f32.mrf.mxu0
        %v1601 = vadd.f32 %v1497, %v1600
        %1602 = vmatmul.f32.gmra.mxu0 %v1471
        %v1603 = vpop.f32.mrf.mxu0
        %v1604 = vadd.f32 %v1497, %v1603
        %1605 = vmatmul.f32.gmra.mxu0 %v1474
        %v1606 = vpop.f32.mrf.mxu0
        %v1607 = vadd.f32 %v1497, %v1606
        %1608 = vmatmul.f32.gmra.mxu0 %v1477
        %v1609 = vpop.f32.mrf.mxu0
        %v1610 = vadd.f32 %v1497, %v1609
        %1611 = vdwg.mxu0
        %v1612 = vmax.f32 %v1517, 0.0
        %v1613 = vmax.f32 %v1520, 0.0
        %v1614 = vmax.f32 %v1523, 0.0
        %v1615 = vmax.f32 %v1526, 0.0
        %v1616 = vmax.f32 %v1529, 0.0
        %v1617 = vmax.f32 %v1532, 0.0
        %v1618 = vmax.f32 %v1535, 0.0
        %v1619 = vmax.f32 %v1538, 0.0
        %v1620 = vmax.f32 %v1541, 0.0
        %v1621 = vmax.f32 %v1544, 0.0
        %v1622 = vmax.f32 %v1547, 0.0
        %v1623 = vmax.f32 %v1550, 0.0
        %v1624 = vmax.f32 %v1553, 0.0
        %v1625 = vmax.f32 %v1556, 0.0
        %v1626 = vmax.f32 %v1559, 0.0
        %v1627 = vmax.f32 %v1562, 0.0
        %v1628 = vmax.f32 %v1565, 0.0
        %v1629 = vmax.f32 %v1568, 0.0
        %v1630 = vmax.f32 %v1571, 0.0
        %v1631 = vmax.f32 %v1574, 0.0
        %v1632 = vmax.f32 %v1577, 0.0
        %v1633 = vmax.f32 %v1580, 0.0
        %v1634 = vmax.f32 %v1583, 0.0
        %v1635 = vmax.f32 %v1586, 0.0
        %v1636 = vmax.f32 %v1589, 0.0
        %v1637 = vmax.f32 %v1592, 0.0
        %v1638 = vmax.f32 %v1595, 0.0
        %v1639 = vmax.f32 %v1598, 0.0
        %v1640 = vmax.f32 %v1601, 0.0
        %v1641 = vmax.f32 %v1604, 0.0
        %v1642 = vmax.f32 %v1607, 0.0
        %v1643 = vmax.f32 %v1610, 0.0
        %v1644 = vld [vmem:[#allocation20] sm:$0xff]
        %v1645 = vld [vmem:[#allocation20 + $0x8] sm:$0xff]
        %v1646 = vld [vmem:[#allocation20 + $0x10] sm:$0xff]
        %v1647 = vld [vmem:[#allocation20 + $0x18] sm:$0xff]
        %v1648 = vld [vmem:[#allocation20 + $0x20] sm:$0xff]
        %v1649 = vld [vmem:[#allocation20 + $0x28] sm:$0xff]
        %v1650 = vld [vmem:[#allocation20 + $0x30] sm:$0xff]
        %v1651 = vld [vmem:[#allocation20 + $0x38] sm:$0xff]
        %v1652 = vld [vmem:[#allocation20 + $0x40] sm:$0xff]
        %v1653 = vld [vmem:[#allocation20 + $0x48] sm:$0xff]
        %v1654 = vld [vmem:[#allocation20 + $0x50] sm:$0xff]
        %v1655 = vld [vmem:[#allocation20 + $0x58] sm:$0xff]
        %v1656 = vld [vmem:[#allocation20 + $0x60] sm:$0xff]
        %v1657 = vld [vmem:[#allocation20 + $0x68] sm:$0xff]
        %v1658 = vld [vmem:[#allocation20 + $0x70] sm:$0xff]
        %v1659 = vld [vmem:[#allocation20 + $0x78] sm:$0xff]
        %v1660 = vld [vmem:[#allocation22] sm:$0x1]
        %v1662 = vperm.slane %v1660, 0
        %1664 = vmatpush.msra.mxu0 %v1659
        %1665 = vmatpush.msra.mxu0 %v1658
        %1666 = vmatpush.msra.mxu0 %v1657
        %1667 = vmatpush.msra.mxu0 %v1656
        %1668 = vmatpush.msra.mxu0 %v1655
        %1669 = vmatpush.msra.mxu0 %v1654
        %1670 = vmatpush.msra.mxu0 %v1653
        %1671 = vmatpush.msra.mxu0 %v1652
        %1672 = vmatpush.msra.mxu0 %v1651
        %1673 = vmatpush.msra.mxu0 %v1650
        %1674 = vmatpush.msra.mxu0 %v1649
        %1675 = vmatpush.msra.mxu0 %v1648
        %1676 = vmatpush.msra.mxu0 %v1647
        %1677 = vmatpush.msra.mxu0 %v1646
        %1678 = vmatpush.msra.mxu0 %v1645
        %1679 = vmatpush.msra.mxu0 %v1644
        %1680 = vmatmul.f32.gmra.mxu0 %v1612
        %v1681 = vpop.f32.mrf.mxu0
        %v1682 = vadd.f32 %v1662, %v1681
        %1683 = vmatmul.f32.gmra.mxu0 %v1613
        %v1684 = vpop.f32.mrf.mxu0
        %v1685 = vadd.f32 %v1662, %v1684
        %1686 = vmatmul.f32.gmra.mxu0 %v1614
        %v1687 = vpop.f32.mrf.mxu0
        %v1688 = vadd.f32 %v1662, %v1687
        %1689 = vmatmul.f32.gmra.mxu0 %v1615
        %v1690 = vpop.f32.mrf.mxu0
        %v1691 = vadd.f32 %v1662, %v1690
        %1692 = vmatmul.f32.gmra.mxu0 %v1616
        %v1693 = vpop.f32.mrf.mxu0
        %v1694 = vadd.f32 %v1662, %v1693
        %1695 = vmatmul.f32.gmra.mxu0 %v1617
        %v1696 = vpop.f32.mrf.mxu0
        %v1697 = vadd.f32 %v1662, %v1696
        %1698 = vmatmul.f32.gmra.mxu0 %v1618
        %v1699 = vpop.f32.mrf.mxu0
        %v1700 = vadd.f32 %v1662, %v1699
        %1701 = vmatmul.f32.gmra.mxu0 %v1619
        %v1702 = vpop.f32.mrf.mxu0
        %v1703 = vadd.f32 %v1662, %v1702
        %1704 = vmatmul.f32.gmra.mxu0 %v1620
        %v1705 = vpop.f32.mrf.mxu0
        %v1706 = vadd.f32 %v1662, %v1705
        %1707 = vmatmul.f32.gmra.mxu0 %v1621
        %v1708 = vpop.f32.mrf.mxu0
        %v1709 = vadd.f32 %v1662, %v1708
        %1710 = vmatmul.f32.gmra.mxu0 %v1622
        %v1711 = vpop.f32.mrf.mxu0
        %v1712 = vadd.f32 %v1662, %v1711
        %1713 = vmatmul.f32.gmra.mxu0 %v1623
        %v1714 = vpop.f32.mrf.mxu0
        %v1715 = vadd.f32 %v1662, %v1714
        %1716 = vmatmul.f32.gmra.mxu0 %v1624
        %v1717 = vpop.f32.mrf.mxu0
        %v1718 = vadd.f32 %v1662, %v1717
        %1719 = vmatmul.f32.gmra.mxu0 %v1625
        %v1720 = vpop.f32.mrf.mxu0
        %v1721 = vadd.f32 %v1662, %v1720
        %1722 = vmatmul.f32.gmra.mxu0 %v1626
        %v1723 = vpop.f32.mrf.mxu0
        %v1724 = vadd.f32 %v1662, %v1723
        %1725 = vmatmul.f32.gmra.mxu0 %v1627
        %v1726 = vpop.f32.mrf.mxu0
        %v1727 = vadd.f32 %v1662, %v1726
        %1728 = vmatmul.f32.gmra.mxu0 %v1628
        %v1729 = vpop.f32.mrf.mxu0
        %v1730 = vadd.f32 %v1662, %v1729
        %1731 = vmatmul.f32.gmra.mxu0 %v1629
        %v1732 = vpop.f32.mrf.mxu0
        %v1733 = vadd.f32 %v1662, %v1732
        %1734 = vmatmul.f32.gmra.mxu0 %v1630
        %v1735 = vpop.f32.mrf.mxu0
        %v1736 = vadd.f32 %v1662, %v1735
        %1737 = vmatmul.f32.gmra.mxu0 %v1631
        %v1738 = vpop.f32.mrf.mxu0
        %v1739 = vadd.f32 %v1662, %v1738
        %1740 = vmatmul.f32.gmra.mxu0 %v1632
        %v1741 = vpop.f32.mrf.mxu0
        %v1742 = vadd.f32 %v1662, %v1741
        %1743 = vmatmul.f32.gmra.mxu0 %v1633
        %v1744 = vpop.f32.mrf.mxu0
        %v1745 = vadd.f32 %v1662, %v1744
        %1746 = vmatmul.f32.gmra.mxu0 %v1634
        %v1747 = vpop.f32.mrf.mxu0
        %v1748 = vadd.f32 %v1662, %v1747
        %1749 = vmatmul.f32.gmra.mxu0 %v1635
        %v1750 = vpop.f32.mrf.mxu0
        %v1751 = vadd.f32 %v1662, %v1750
        %1752 = vmatmul.f32.gmra.mxu0 %v1636
        %v1753 = vpop.f32.mrf.mxu0
        %v1754 = vadd.f32 %v1662, %v1753
        %1755 = vmatmul.f32.gmra.mxu0 %v1637
        %v1756 = vpop.f32.mrf.mxu0
        %v1757 = vadd.f32 %v1662, %v1756
        %1758 = vmatmul.f32.gmra.mxu0 %v1638
        %v1759 = vpop.f32.mrf.mxu0
        %v1760 = vadd.f32 %v1662, %v1759
        %1761 = vmatmul.f32.gmra.mxu0 %v1639
        %v1762 = vpop.f32.mrf.mxu0
        %v1763 = vadd.f32 %v1662, %v1762
        %1764 = vmatmul.f32.gmra.mxu0 %v1640
        %v1765 = vpop.f32.mrf.mxu0
        %v1766 = vadd.f32 %v1662, %v1765
        %1767 = vmatmul.f32.gmra.mxu0 %v1641
        %v1768 = vpop.f32.mrf.mxu0
        %v1769 = vadd.f32 %v1662, %v1768
        %1770 = vmatmul.f32.gmra.mxu0 %v1642
        %v1771 = vpop.f32.mrf.mxu0
        %v1772 = vadd.f32 %v1662, %v1771
        %1773 = vmatmul.f32.gmra.mxu0 %v1643
        %v1774 = vpop.f32.mrf.mxu0
        %v1775 = vadd.f32 %v1662, %v1774
        %1776 = vdwg.mxu0
        %v1777 = vmax.f32 %v1682, 0.0
        %v1778 = vmax.f32 %v1685, 0.0
        %v1779 = vmax.f32 %v1688, 0.0
        %v1780 = vmax.f32 %v1691, 0.0
        %v1781 = vmax.f32 %v1694, 0.0
        %v1782 = vmax.f32 %v1697, 0.0
        %v1783 = vmax.f32 %v1700, 0.0
        %v1784 = vmax.f32 %v1703, 0.0
        %v1785 = vmax.f32 %v1706, 0.0
        %v1786 = vmax.f32 %v1709, 0.0
        %v1787 = vmax.f32 %v1712, 0.0
        %v1788 = vmax.f32 %v1715, 0.0
        %v1789 = vmax.f32 %v1718, 0.0
        %v1790 = vmax.f32 %v1721, 0.0
        %v1791 = vmax.f32 %v1724, 0.0
        %v1792 = vmax.f32 %v1727, 0.0
        %v1793 = vmax.f32 %v1730, 0.0
        %v1794 = vmax.f32 %v1733, 0.0
        %v1795 = vmax.f32 %v1736, 0.0
        %v1796 = vmax.f32 %v1739, 0.0
        %v1797 = vmax.f32 %v1742, 0.0
        %v1798 = vmax.f32 %v1745, 0.0
        %v1799 = vmax.f32 %v1748, 0.0
        %v1800 = vmax.f32 %v1751, 0.0
        %v1801 = vmax.f32 %v1754, 0.0
        %v1802 = vmax.f32 %v1757, 0.0
        %v1803 = vmax.f32 %v1760, 0.0
        %v1804 = vmax.f32 %v1763, 0.0
        %v1805 = vmax.f32 %v1766, 0.0
        %v1806 = vmax.f32 %v1769, 0.0
        %v1807 = vmax.f32 %v1772, 0.0
        %v1808 = vmax.f32 %v1775, 0.0
        %v1809 = vld [vmem:[#allocation23] sm:$0xff]
        %v1810 = vld [vmem:[#allocation23 + $0x8] sm:$0xff]
        %v1811 = vld [vmem:[#allocation23 + $0x10] sm:$0xff]
        %v1812 = vld [vmem:[#allocation23 + $0x18] sm:$0xff]
        %v1813 = vld [vmem:[#allocation23 + $0x20] sm:$0xff]
        %v1814 = vld [vmem:[#allocation23 + $0x28] sm:$0xff]
        %v1815 = vld [vmem:[#allocation23 + $0x30] sm:$0xff]
        %v1816 = vld [vmem:[#allocation23 + $0x38] sm:$0xff]
        %v1817 = vld [vmem:[#allocation23 + $0x40] sm:$0xff]
        %v1818 = vld [vmem:[#allocation23 + $0x48] sm:$0xff]
        %v1819 = vld [vmem:[#allocation23 + $0x50] sm:$0xff]
        %v1820 = vld [vmem:[#allocation23 + $0x58] sm:$0xff]
        %v1821 = vld [vmem:[#allocation23 + $0x60] sm:$0xff]
        %v1822 = vld [vmem:[#allocation23 + $0x68] sm:$0xff]
        %v1823 = vld [vmem:[#allocation23 + $0x70] sm:$0xff]
        %v1824 = vld [vmem:[#allocation23 + $0x78] sm:$0xff]
        %v1825 = vld [vmem:[#allocation25] sm:$0x1]
        %v1827 = vperm.slane %v1825, 0
        %1829 = vmatpush.msra.mxu0 %v1824
        %1830 = vmatpush.msra.mxu0 %v1823
        %1831 = vmatpush.msra.mxu0 %v1822
        %1832 = vmatpush.msra.mxu0 %v1821
        %1833 = vmatpush.msra.mxu0 %v1820
        %1834 = vmatpush.msra.mxu0 %v1819
        %1835 = vmatpush.msra.mxu0 %v1818
        %1836 = vmatpush.msra.mxu0 %v1817
        %1837 = vmatpush.msra.mxu0 %v1816
        %1838 = vmatpush.msra.mxu0 %v1815
        %1839 = vmatpush.msra.mxu0 %v1814
        %1840 = vmatpush.msra.mxu0 %v1813
        %1841 = vmatpush.msra.mxu0 %v1812
        %1842 = vmatpush.msra.mxu0 %v1811
        %1843 = vmatpush.msra.mxu0 %v1810
        %1844 = vmatpush.msra.mxu0 %v1809
        %1845 = vmatmul.f32.gmra.mxu0 %v1777
        %v1846 = vpop.f32.mrf.mxu0
        %v1847 = vadd.f32 %v1827, %v1846
        %1848 = vmatmul.f32.gmra.mxu0 %v1778
        %v1849 = vpop.f32.mrf.mxu0
        %v1850 = vadd.f32 %v1827, %v1849
        %1851 = vmatmul.f32.gmra.mxu0 %v1779
        %v1852 = vpop.f32.mrf.mxu0
        %v1853 = vadd.f32 %v1827, %v1852
        %1854 = vmatmul.f32.gmra.mxu0 %v1780
        %v1855 = vpop.f32.mrf.mxu0
        %v1856 = vadd.f32 %v1827, %v1855
        %1857 = vmatmul.f32.gmra.mxu0 %v1781
        %v1858 = vpop.f32.mrf.mxu0
        %v1859 = vadd.f32 %v1827, %v1858
        %1860 = vmatmul.f32.gmra.mxu0 %v1782
        %v1861 = vpop.f32.mrf.mxu0
        %v1862 = vadd.f32 %v1827, %v1861
        %1863 = vmatmul.f32.gmra.mxu0 %v1783
        %v1864 = vpop.f32.mrf.mxu0
        %v1865 = vadd.f32 %v1827, %v1864
        %1866 = vmatmul.f32.gmra.mxu0 %v1784
        %v1867 = vpop.f32.mrf.mxu0
        %v1868 = vadd.f32 %v1827, %v1867
        %1869 = vmatmul.f32.gmra.mxu0 %v1785
        %v1870 = vpop.f32.mrf.mxu0
        %v1871 = vadd.f32 %v1827, %v1870
        %1872 = vmatmul.f32.gmra.mxu0 %v1786
        %v1873 = vpop.f32.mrf.mxu0
        %v1874 = vadd.f32 %v1827, %v1873
        %1875 = vmatmul.f32.gmra.mxu0 %v1787
        %v1876 = vpop.f32.mrf.mxu0
        %v1877 = vadd.f32 %v1827, %v1876
        %1878 = vmatmul.f32.gmra.mxu0 %v1788
        %v1879 = vpop.f32.mrf.mxu0
        %v1880 = vadd.f32 %v1827, %v1879
        %1881 = vmatmul.f32.gmra.mxu0 %v1789
        %v1882 = vpop.f32.mrf.mxu0
        %v1883 = vadd.f32 %v1827, %v1882
        %1884 = vmatmul.f32.gmra.mxu0 %v1790
        %v1885 = vpop.f32.mrf.mxu0
        %v1886 = vadd.f32 %v1827, %v1885
        %1887 = vmatmul.f32.gmra.mxu0 %v1791
        %v1888 = vpop.f32.mrf.mxu0
        %v1889 = vadd.f32 %v1827, %v1888
        %1890 = vmatmul.f32.gmra.mxu0 %v1792
        %v1891 = vpop.f32.mrf.mxu0
        %v1892 = vadd.f32 %v1827, %v1891
        %1893 = vmatmul.f32.gmra.mxu0 %v1793
        %v1894 = vpop.f32.mrf.mxu0
        %v1895 = vadd.f32 %v1827, %v1894
        %1896 = vmatmul.f32.gmra.mxu0 %v1794
        %v1897 = vpop.f32.mrf.mxu0
        %v1898 = vadd.f32 %v1827, %v1897
        %1899 = vmatmul.f32.gmra.mxu0 %v1795
        %v1900 = vpop.f32.mrf.mxu0
        %v1901 = vadd.f32 %v1827, %v1900
        %1902 = vmatmul.f32.gmra.mxu0 %v1796
        %v1903 = vpop.f32.mrf.mxu0
        %v1904 = vadd.f32 %v1827, %v1903
        %1905 = vmatmul.f32.gmra.mxu0 %v1797
        %v1906 = vpop.f32.mrf.mxu0
        %v1907 = vadd.f32 %v1827, %v1906
        %1908 = vmatmul.f32.gmra.mxu0 %v1798
        %v1909 = vpop.f32.mrf.mxu0
        %v1910 = vadd.f32 %v1827, %v1909
        %1911 = vmatmul.f32.gmra.mxu0 %v1799
        %v1912 = vpop.f32.mrf.mxu0
        %v1913 = vadd.f32 %v1827, %v1912
        %1914 = vmatmul.f32.gmra.mxu0 %v1800
        %v1915 = vpop.f32.mrf.mxu0
        %v1916 = vadd.f32 %v1827, %v1915
        %1917 = vmatmul.f32.gmra.mxu0 %v1801
        %v1918 = vpop.f32.mrf.mxu0
        %v1919 = vadd.f32 %v1827, %v1918
        %1920 = vmatmul.f32.gmra.mxu0 %v1802
        %v1921 = vpop.f32.mrf.mxu0
        %v1922 = vadd.f32 %v1827, %v1921
        %1923 = vmatmul.f32.gmra.mxu0 %v1803
        %v1924 = vpop.f32.mrf.mxu0
        %v1925 = vadd.f32 %v1827, %v1924
        %1926 = vmatmul.f32.gmra.mxu0 %v1804
        %v1927 = vpop.f32.mrf.mxu0
        %v1928 = vadd.f32 %v1827, %v1927
        %1929 = vmatmul.f32.gmra.mxu0 %v1805
        %v1930 = vpop.f32.mrf.mxu0
        %v1931 = vadd.f32 %v1827, %v1930
        %1932 = vmatmul.f32.gmra.mxu0 %v1806
        %v1933 = vpop.f32.mrf.mxu0
        %v1934 = vadd.f32 %v1827, %v1933
        %1935 = vmatmul.f32.gmra.mxu0 %v1807
        %v1936 = vpop.f32.mrf.mxu0
        %v1937 = vadd.f32 %v1827, %v1936
        %1938 = vmatmul.f32.gmra.mxu0 %v1808
        %v1939 = vpop.f32.mrf.mxu0
        %v1940 = vadd.f32 %v1827, %v1939
        %1941 = vdwg.mxu0
        %v1942 = vmax.f32 %v1847, 0.0
        %v1943 = vmax.f32 %v1850, 0.0
        %v1944 = vmax.f32 %v1853, 0.0
        %v1945 = vmax.f32 %v1856, 0.0
        %v1946 = vmax.f32 %v1859, 0.0
        %v1947 = vmax.f32 %v1862, 0.0
        %v1948 = vmax.f32 %v1865, 0.0
        %v1949 = vmax.f32 %v1868, 0.0
        %v1950 = vmax.f32 %v1871, 0.0
        %v1951 = vmax.f32 %v1874, 0.0
        %v1952 = vmax.f32 %v1877, 0.0
        %v1953 = vmax.f32 %v1880, 0.0
        %v1954 = vmax.f32 %v1883, 0.0
        %v1955 = vmax.f32 %v1886, 0.0
        %v1956 = vmax.f32 %v1889, 0.0
        %v1957 = vmax.f32 %v1892, 0.0
        %v1958 = vmax.f32 %v1895, 0.0
        %v1959 = vmax.f32 %v1898, 0.0
        %v1960 = vmax.f32 %v1901, 0.0
        %v1961 = vmax.f32 %v1904, 0.0
        %v1962 = vmax.f32 %v1907, 0.0
        %v1963 = vmax.f32 %v1910, 0.0
        %v1964 = vmax.f32 %v1913, 0.0
        %v1965 = vmax.f32 %v1916, 0.0
        %v1966 = vmax.f32 %v1919, 0.0
        %v1967 = vmax.f32 %v1922, 0.0
        %v1968 = vmax.f32 %v1925, 0.0
        %v1969 = vmax.f32 %v1928, 0.0
        %v1970 = vmax.f32 %v1931, 0.0
        %v1971 = vmax.f32 %v1934, 0.0
        %v1972 = vmax.f32 %v1937, 0.0
        %v1973 = vmax.f32 %v1940, 0.0
        %v1974 = vld [vmem:[#allocation26] sm:$0xff]
        %v1975 = vld [vmem:[#allocation26 + $0x8] sm:$0xff]
        %v1976 = vld [vmem:[#allocation26 + $0x10] sm:$0xff]
        %v1977 = vld [vmem:[#allocation26 + $0x18] sm:$0xff]
        %v1978 = vld [vmem:[#allocation26 + $0x20] sm:$0xff]
        %v1979 = vld [vmem:[#allocation26 + $0x28] sm:$0xff]
        %v1980 = vld [vmem:[#allocation26 + $0x30] sm:$0xff]
        %v1981 = vld [vmem:[#allocation26 + $0x38] sm:$0xff]
        %v1982 = vld [vmem:[#allocation26 + $0x40] sm:$0xff]
        %v1983 = vld [vmem:[#allocation26 + $0x48] sm:$0xff]
        %v1984 = vld [vmem:[#allocation26 + $0x50] sm:$0xff]
        %v1985 = vld [vmem:[#allocation26 + $0x58] sm:$0xff]
        %v1986 = vld [vmem:[#allocation26 + $0x60] sm:$0xff]
        %v1987 = vld [vmem:[#allocation26 + $0x68] sm:$0xff]
        %v1988 = vld [vmem:[#allocation26 + $0x70] sm:$0xff]
        %v1989 = vld [vmem:[#allocation26 + $0x78] sm:$0xff]
        %v1990 = vld [vmem:[#allocation28] sm:$0x1]
        %v1992 = vperm.slane %v1990, 0
        %1994 = vmatpush.msra.mxu0 %v1989
        %1995 = vmatpush.msra.mxu0 %v1988
        %1996 = vmatpush.msra.mxu0 %v1987
        %1997 = vmatpush.msra.mxu0 %v1986
        %1998 = vmatpush.msra.mxu0 %v1985
        %1999 = vmatpush.msra.mxu0 %v1984
        %2000 = vmatpush.msra.mxu0 %v1983
        %2001 = vmatpush.msra.mxu0 %v1982
        %2002 = vmatpush.msra.mxu0 %v1981
        %2003 = vmatpush.msra.mxu0 %v1980
        %2004 = vmatpush.msra.mxu0 %v1979
        %2005 = vmatpush.msra.mxu0 %v1978
        %2006 = vmatpush.msra.mxu0 %v1977
        %2007 = vmatpush.msra.mxu0 %v1976
        %2008 = vmatpush.msra.mxu0 %v1975
        %2009 = vmatpush.msra.mxu0 %v1974
        %2010 = vmatmul.f32.gmra.mxu0 %v1942
        %v2011 = vpop.f32.mrf.mxu0
        %v2012 = vadd.f32 %v1992, %v2011
        %2013 = vmatmul.f32.gmra.mxu0 %v1943
        %v2014 = vpop.f32.mrf.mxu0
        %v2015 = vadd.f32 %v1992, %v2014
        %2016 = vmatmul.f32.gmra.mxu0 %v1944
        %v2017 = vpop.f32.mrf.mxu0
        %v2018 = vadd.f32 %v1992, %v2017
        %2019 = vmatmul.f32.gmra.mxu0 %v1945
        %v2020 = vpop.f32.mrf.mxu0
        %v2021 = vadd.f32 %v1992, %v2020
        %2022 = vmatmul.f32.gmra.mxu0 %v1946
        %v2023 = vpop.f32.mrf.mxu0
        %v2024 = vadd.f32 %v1992, %v2023
        %2025 = vmatmul.f32.gmra.mxu0 %v1947
        %v2026 = vpop.f32.mrf.mxu0
        %v2027 = vadd.f32 %v1992, %v2026
        %2028 = vmatmul.f32.gmra.mxu0 %v1948
        %v2029 = vpop.f32.mrf.mxu0
        %v2030 = vadd.f32 %v1992, %v2029
        %2031 = vmatmul.f32.gmra.mxu0 %v1949
        %v2032 = vpop.f32.mrf.mxu0
        %v2033 = vadd.f32 %v1992, %v2032
        %2034 = vmatmul.f32.gmra.mxu0 %v1950
        %v2035 = vpop.f32.mrf.mxu0
        %v2036 = vadd.f32 %v1992, %v2035
        %2037 = vmatmul.f32.gmra.mxu0 %v1951
        %v2038 = vpop.f32.mrf.mxu0
        %v2039 = vadd.f32 %v1992, %v2038
        %2040 = vmatmul.f32.gmra.mxu0 %v1952
        %v2041 = vpop.f32.mrf.mxu0
        %v2042 = vadd.f32 %v1992, %v2041
        %2043 = vmatmul.f32.gmra.mxu0 %v1953
        %v2044 = vpop.f32.mrf.mxu0
        %v2045 = vadd.f32 %v1992, %v2044
        %2046 = vmatmul.f32.gmra.mxu0 %v1954
        %v2047 = vpop.f32.mrf.mxu0
        %v2048 = vadd.f32 %v1992, %v2047
        %2049 = vmatmul.f32.gmra.mxu0 %v1955
        %v2050 = vpop.f32.mrf.mxu0
        %v2051 = vadd.f32 %v1992, %v2050
        %2052 = vmatmul.f32.gmra.mxu0 %v1956
        %v2053 = vpop.f32.mrf.mxu0
        %v2054 = vadd.f32 %v1992, %v2053
        %2055 = vmatmul.f32.gmra.mxu0 %v1957
        %v2056 = vpop.f32.mrf.mxu0
        %v2057 = vadd.f32 %v1992, %v2056
        %2058 = vmatmul.f32.gmra.mxu0 %v1958
        %v2059 = vpop.f32.mrf.mxu0
        %v2060 = vadd.f32 %v1992, %v2059
        %2061 = vmatmul.f32.gmra.mxu0 %v1959
        %v2062 = vpop.f32.mrf.mxu0
        %v2063 = vadd.f32 %v1992, %v2062
        %2064 = vmatmul.f32.gmra.mxu0 %v1960
        %v2065 = vpop.f32.mrf.mxu0
        %v2066 = vadd.f32 %v1992, %v2065
        %2067 = vmatmul.f32.gmra.mxu0 %v1961
        %v2068 = vpop.f32.mrf.mxu0
        %v2069 = vadd.f32 %v1992, %v2068
        %2070 = vmatmul.f32.gmra.mxu0 %v1962
        %v2071 = vpop.f32.mrf.mxu0
        %v2072 = vadd.f32 %v1992, %v2071
        %2073 = vmatmul.f32.gmra.mxu0 %v1963
        %v2074 = vpop.f32.mrf.mxu0
        %v2075 = vadd.f32 %v1992, %v2074
        %2076 = vmatmul.f32.gmra.mxu0 %v1964
        %v2077 = vpop.f32.mrf.mxu0
        %v2078 = vadd.f32 %v1992, %v2077
        %2079 = vmatmul.f32.gmra.mxu0 %v1965
        %v2080 = vpop.f32.mrf.mxu0
        %v2081 = vadd.f32 %v1992, %v2080
        %2082 = vmatmul.f32.gmra.mxu0 %v1966
        %v2083 = vpop.f32.mrf.mxu0
        %v2084 = vadd.f32 %v1992, %v2083
        %2085 = vmatmul.f32.gmra.mxu0 %v1967
        %v2086 = vpop.f32.mrf.mxu0
        %v2087 = vadd.f32 %v1992, %v2086
        %2088 = vmatmul.f32.gmra.mxu0 %v1968
        %v2089 = vpop.f32.mrf.mxu0
        %v2090 = vadd.f32 %v1992, %v2089
        %2091 = vmatmul.f32.gmra.mxu0 %v1969
        %v2092 = vpop.f32.mrf.mxu0
        %v2093 = vadd.f32 %v1992, %v2092
        %2094 = vmatmul.f32.gmra.mxu0 %v1970
        %v2095 = vpop.f32.mrf.mxu0
        %v2096 = vadd.f32 %v1992, %v2095
        %2097 = vmatmul.f32.gmra.mxu0 %v1971
        %v2098 = vpop.f32.mrf.mxu0
        %v2099 = vadd.f32 %v1992, %v2098
        %2100 = vmatmul.f32.gmra.mxu0 %v1972
        %v2101 = vpop.f32.mrf.mxu0
        %v2102 = vadd.f32 %v1992, %v2101
        %2103 = vmatmul.f32.gmra.mxu0 %v1973
        %v2104 = vpop.f32.mrf.mxu0
        %v2105 = vadd.f32 %v1992, %v2104
        %2106 = vdwg.mxu0
        %2107 = vst [vmem:[%s816] sm:$0xff] %v2012
        %2108 = vst [vmem:[%s816 + $0x28] sm:$0xff] %v2015
        %2109 = vst [vmem:[%s816 + $0x50] sm:$0xff] %v2018
        %2110 = vst [vmem:[%s816 + $0x78] sm:$0xff] %v2021
        %2111 = vst [vmem:[%s816 + $0xa0] sm:$0xff] %v2024
        %2112 = vst [vmem:[%s816 + $0xc8] sm:$0xff] %v2027
        %2113 = vst [vmem:[%s816 + $0xf0] sm:$0xff] %v2030
        %2114 = vst [vmem:[%s816 + $0x118] sm:$0xff] %v2033
        %2115 = vst [vmem:[%s816 + $0x140] sm:$0xff] %v2036
        %2116 = vst [vmem:[%s816 + $0x168] sm:$0xff] %v2039
        %2117 = vst [vmem:[%s816 + $0x190] sm:$0xff] %v2042
        %2118 = vst [vmem:[%s816 + $0x1b8] sm:$0xff] %v2045
        %2119 = vst [vmem:[%s816 + $0x1e0] sm:$0xff] %v2048
        %2120 = vst [vmem:[%s816 + $0x208] sm:$0xff] %v2051
        %2121 = vst [vmem:[%s816 + $0x230] sm:$0xff] %v2054
        %2122 = vst [vmem:[%s816 + $0x258] sm:$0xff] %v2057
        %2123 = vst [vmem:[%s816 + $0x280] sm:$0xff] %v2060
        %2124 = vst [vmem:[%s816 + $0x2a8] sm:$0xff] %v2063
        %2125 = vst [vmem:[%s816 + $0x2d0] sm:$0xff] %v2066
        %2126 = vst [vmem:[%s816 + $0x2f8] sm:$0xff] %v2069
        %2127 = vst [vmem:[%s816 + $0x320] sm:$0xff] %v2072
        %2128 = vst [vmem:[%s816 + $0x348] sm:$0xff] %v2075
        %2129 = vst [vmem:[%s816 + $0x370] sm:$0xff] %v2078
        %2130 = vst [vmem:[%s816 + $0x398] sm:$0xff] %v2081
        %2131 = vst [vmem:[%s816 + $0x3c0] sm:$0xff] %v2084
        %2132 = vst [vmem:[%s816 + $0x3e8] sm:$0xff] %v2087
        %2133 = vst [vmem:[%s816 + $0x410] sm:$0xff] %v2090
        %2134 = vst [vmem:[%s816 + $0x438] sm:$0xff] %v2093
        %2135 = vst [vmem:[%s816 + $0x460] sm:$0xff] %v2096
        %2136 = vst [vmem:[%s816 + $0x488] sm:$0xff] %v2099
        %2137 = vst [vmem:[%s816 + $0x4b0] sm:$0xff] %v2102
        %2138 = vst [vmem:[%s816 + $0x4d8] sm:$0xff] %v2105
        %2139 = vst [vmem:[%s816 + $0x8] sm:$0xff] %v984
        %2140 = vst [vmem:[%s816 + $0x30] sm:$0xff] %v985
        %2141 = vst [vmem:[%s816 + $0x58] sm:$0xff] %v986
        %2142 = vst [vmem:[%s816 + $0x80] sm:$0xff] %v987
        %2143 = vst [vmem:[%s816 + $0xa8] sm:$0xff] %v988
        %2144 = vst [vmem:[%s816 + $0xd0] sm:$0xff] %v989
        %2145 = vst [vmem:[%s816 + $0xf8] sm:$0xff] %v990
        %2146 = vst [vmem:[%s816 + $0x120] sm:$0xff] %v991
        %2147 = vst [vmem:[%s816 + $0x148] sm:$0xff] %v992
        %2148 = vst [vmem:[%s816 + $0x170] sm:$0xff] %v993
        %2149 = vst [vmem:[%s816 + $0x198] sm:$0xff] %v994
        %2150 = vst [vmem:[%s816 + $0x1c0] sm:$0xff] %v995
        %2151 = vst [vmem:[%s816 + $0x1e8] sm:$0xff] %v996
        %2152 = vst [vmem:[%s816 + $0x210] sm:$0xff] %v997
        %2153 = vst [vmem:[%s816 + $0x238] sm:$0xff] %v998
        %2154 = vst [vmem:[%s816 + $0x260] sm:$0xff] %v999
        %2155 = vst [vmem:[%s816 + $0x288] sm:$0xff] %v1000
        %2156 = vst [vmem:[%s816 + $0x2b0] sm:$0xff] %v1001
        %2157 = vst [vmem:[%s816 + $0x2d8] sm:$0xff] %v1002
        %2158 = vst [vmem:[%s816 + $0x300] sm:$0xff] %v1003
        %2159 = vst [vmem:[%s816 + $0x328] sm:$0xff] %v1004
        %2160 = vst [vmem:[%s816 + $0x350] sm:$0xff] %v1005
        %2161 = vst [vmem:[%s816 + $0x378] sm:$0xff] %v1006
        %2162 = vst [vmem:[%s816 + $0x3a0] sm:$0xff] %v1007
        %2163 = vst [vmem:[%s816 + $0x3c8] sm:$0xff] %v1008
        %2164 = vst [vmem:[%s816 + $0x3f0] sm:$0xff] %v1009
        %2165 = vst [vmem:[%s816 + $0x418] sm:$0xff] %v1010
        %2166 = vst [vmem:[%s816 + $0x440] sm:$0xff] %v1011
        %2167 = vst [vmem:[%s816 + $0x468] sm:$0xff] %v1012
        %2168 = vst [vmem:[%s816 + $0x490] sm:$0xff] %v1013
        %2169 = vst [vmem:[%s816 + $0x4b8] sm:$0xff] %v1014
        %2170 = vst [vmem:[%s816 + $0x4e0] sm:$0xff] %v1015
        %2171 = vst [vmem:[%s816 + $0x10] sm:$0xff] %v1149
        %2172 = vst [vmem:[%s816 + $0x38] sm:$0xff] %v1150
        %2173 = vst [vmem:[%s816 + $0x60] sm:$0xff] %v1151
        %2174 = vst [vmem:[%s816 + $0x88] sm:$0xff] %v1152
        %2175 = vst [vmem:[%s816 + $0xb0] sm:$0xff] %v1153
        %2176 = vst [vmem:[%s816 + $0xd8] sm:$0xff] %v1154
        %2177 = vst [vmem:[%s816 + $0x100] sm:$0xff] %v1155
        %2178 = vst [vmem:[%s816 + $0x128] sm:$0xff] %v1156
        %2179 = vst [vmem:[%s816 + $0x150] sm:$0xff] %v1157
        %2180 = vst [vmem:[%s816 + $0x178] sm:$0xff] %v1158
        %2181 = vst [vmem:[%s816 + $0x1a0] sm:$0xff] %v1159
        %2182 = vst [vmem:[%s816 + $0x1c8] sm:$0xff] %v1160
        %2183 = vst [vmem:[%s816 + $0x1f0] sm:$0xff] %v1161
        %2184 = vst [vmem:[%s816 + $0x218] sm:$0xff] %v1162
        %2185 = vst [vmem:[%s816 + $0x240] sm:$0xff] %v1163
        %2186 = vst [vmem:[%s816 + $0x268] sm:$0xff] %v1164
        %2187 = vst [vmem:[%s816 + $0x290] sm:$0xff] %v1165
        %2188 = vst [vmem:[%s816 + $0x2b8] sm:$0xff] %v1166
        %2189 = vst [vmem:[%s816 + $0x2e0] sm:$0xff] %v1167
        %2190 = vst [vmem:[%s816 + $0x308] sm:$0xff] %v1168
        %2191 = vst [vmem:[%s816 + $0x330] sm:$0xff] %v1169
        %2192 = vst [vmem:[%s816 + $0x358] sm:$0xff] %v1170
        %2193 = vst [vmem:[%s816 + $0x380] sm:$0xff] %v1171
        %2194 = vst [vmem:[%s816 + $0x3a8] sm:$0xff] %v1172
        %2195 = vst [vmem:[%s816 + $0x3d0] sm:$0xff] %v1173
        %2196 = vst [vmem:[%s816 + $0x3f8] sm:$0xff] %v1174
        %2197 = vst [vmem:[%s816 + $0x420] sm:$0xff] %v1175
        %2198 = vst [vmem:[%s816 + $0x448] sm:$0xff] %v1176
        %2199 = vst [vmem:[%s816 + $0x470] sm:$0xff] %v1177
        %2200 = vst [vmem:[%s816 + $0x498] sm:$0xff] %v1178
        %2201 = vst [vmem:[%s816 + $0x4c0] sm:$0xff] %v1179
        %2202 = vst [vmem:[%s816 + $0x4e8] sm:$0xff] %v1180
        %2203 = vst [vmem:[%s816 + $0x18] sm:$0xff] %v1314
        %2204 = vst [vmem:[%s816 + $0x40] sm:$0xff] %v1315
        %2205 = vst [vmem:[%s816 + $0x68] sm:$0xff] %v1316
        %2206 = vst [vmem:[%s816 + $0x90] sm:$0xff] %v1317
        %2207 = vst [vmem:[%s816 + $0xb8] sm:$0xff] %v1318
        %2208 = vst [vmem:[%s816 + $0xe0] sm:$0xff] %v1319
        %2209 = vst [vmem:[%s816 + $0x108] sm:$0xff] %v1320
        %2210 = vst [vmem:[%s816 + $0x130] sm:$0xff] %v1321
        %2211 = vst [vmem:[%s816 + $0x158] sm:$0xff] %v1322
        %2212 = vst [vmem:[%s816 + $0x180] sm:$0xff] %v1323
        %2213 = vst [vmem:[%s816 + $0x1a8] sm:$0xff] %v1324
        %2214 = vst [vmem:[%s816 + $0x1d0] sm:$0xff] %v1325
        %2215 = vst [vmem:[%s816 + $0x1f8] sm:$0xff] %v1326
        %2216 = vst [vmem:[%s816 + $0x220] sm:$0xff] %v1327
        %2217 = vst [vmem:[%s816 + $0x248] sm:$0xff] %v1328
        %2218 = vst [vmem:[%s816 + $0x270] sm:$0xff] %v1329
        %2219 = vst [vmem:[%s816 + $0x298] sm:$0xff] %v1330
        %2220 = vst [vmem:[%s816 + $0x2c0] sm:$0xff] %v1331
        %2221 = vst [vmem:[%s816 + $0x2e8] sm:$0xff] %v1332
        %2222 = vst [vmem:[%s816 + $0x310] sm:$0xff] %v1333
        %2223 = vst [vmem:[%s816 + $0x338] sm:$0xff] %v1334
        %2224 = vst [vmem:[%s816 + $0x360] sm:$0xff] %v1335
        %2225 = vst [vmem:[%s816 + $0x388] sm:$0xff] %v1336
        %2226 = vst [vmem:[%s816 + $0x3b0] sm:$0xff] %v1337
        %2227 = vst [vmem:[%s816 + $0x3d8] sm:$0xff] %v1338
        %2228 = vst [vmem:[%s816 + $0x400] sm:$0xff] %v1339
        %2229 = vst [vmem:[%s816 + $0x428] sm:$0xff] %v1340
        %2230 = vst [vmem:[%s816 + $0x450] sm:$0xff] %v1341
        %2231 = vst [vmem:[%s816 + $0x478] sm:$0xff] %v1342
        %2232 = vst [vmem:[%s816 + $0x4a0] sm:$0xff] %v1343
        %2233 = vst [vmem:[%s816 + $0x4c8] sm:$0xff] %v1344
        %2234 = vst [vmem:[%s816 + $0x4f0] sm:$0xff] %v1345
        %2235 = vst [vmem:[%s816 + $0x20] sm:$0xff] %v1384
        %2236 = vst [vmem:[%s816 + $0x48] sm:$0xff] %v1387
        %2237 = vst [vmem:[%s816 + $0x70] sm:$0xff] %v1390
        %2238 = vst [vmem:[%s816 + $0x98] sm:$0xff] %v1393
        %2239 = vst [vmem:[%s816 + $0xc0] sm:$0xff] %v1396
        %2240 = vst [vmem:[%s816 + $0xe8] sm:$0xff] %v1399
        %2241 = vst [vmem:[%s816 + $0x110] sm:$0xff] %v1402
        %2242 = vst [vmem:[%s816 + $0x138] sm:$0xff] %v1405
        %2243 = vst [vmem:[%s816 + $0x160] sm:$0xff] %v1408
        %2244 = vst [vmem:[%s816 + $0x188] sm:$0xff] %v1411
        %2245 = vst [vmem:[%s816 + $0x1b0] sm:$0xff] %v1414
        %2246 = vst [vmem:[%s816 + $0x1d8] sm:$0xff] %v1417
        %2247 = vst [vmem:[%s816 + $0x200] sm:$0xff] %v1420
        %2248 = vst [vmem:[%s816 + $0x228] sm:$0xff] %v1423
        %2249 = vst [vmem:[%s816 + $0x250] sm:$0xff] %v1426
        %2250 = vst [vmem:[%s816 + $0x278] sm:$0xff] %v1429
        %2251 = vst [vmem:[%s816 + $0x2a0] sm:$0xff] %v1432
        %2252 = vst [vmem:[%s816 + $0x2c8] sm:$0xff] %v1435
        %2253 = vst [vmem:[%s816 + $0x2f0] sm:$0xff] %v1438
        %2254 = vst [vmem:[%s816 + $0x318] sm:$0xff] %v1441
        %2255 = vst [vmem:[%s816 + $0x340] sm:$0xff] %v1444
        %2256 = vst [vmem:[%s816 + $0x368] sm:$0xff] %v1447
        %2257 = vst [vmem:[%s816 + $0x390] sm:$0xff] %v1450
        %2258 = vst [vmem:[%s816 + $0x3b8] sm:$0xff] %v1453
        %2259 = vst [vmem:[%s816 + $0x3e0] sm:$0xff] %v1456
        %2260 = vst [vmem:[%s816 + $0x408] sm:$0xff] %v1459
        %2261 = vst [vmem:[%s816 + $0x430] sm:$0xff] %v1462
        %2262 = vst [vmem:[%s816 + $0x458] sm:$0xff] %v1465
        %2263 = vst [vmem:[%s816 + $0x480] sm:$0xff] %v1468
        %2264 = vst [vmem:[%s816 + $0x4a8] sm:$0xff] %v1471
        %2265 = vst [vmem:[%s816 + $0x4d0] sm:$0xff] %v1474
        %2266 = vst [vmem:[%s816 + $0x4f8] sm:$0xff] %v1477
        %s2267 = sand.u32 %s412, 1
        %s2268 = scalar_lea.sflag [#allocation4], %s2267
        %s2269 = sand.u32 %s412, 1
        %s2270 = smul.addr %s2269, 1280
        %s2271 = scalar_lea.vmem [#allocation29], %s2270
        // Predicated region
        $region157: #{tpu_custom_call.1} parent=87 // pred_check
          %p2272 = pneg %p422
        $region158: #{tpu_custom_call.1} parent=87 // pred_check_branch
          %2274 = sbr.rel (%p2272) target = $region160
        $region159: #{tpu_custom_call.1} parent=87 // pred_region
          %s2275 = smul.u32 32, %s42
          %2277 = vsyncadd %s2268, 0
          %s2278 = smul.addr %s2275, 5
          %s2279 = smul.addr %s2278, 8
          %s2280 = scalar_lea.hbm %s17, %s2279
          %s2281 = sshll.u32 %s2271, 4
          %s2282 = int_to_ptr.vmem [resolvable:$true] %s2281
          %s2283 = sshll.u32 %s2280, 4
          %s2284 = int_to_ptr.hbm [resolvable:$true] %s2283
          %2289 = dma.vmem_to_hbm [thread:$0]  %s2282, 20480, %s2284, %s2268, 640, 640, 40
        $region160: #{tpu_custom_call.1} parent=87 // pred_fallthru
          _
      $region88: #{tpu_custom_call.1} parent=5 // pred_fallthru
        _
      %p2290 = scmp.le.s32.totalorder 2, %s37
      // Predicated region
      $region161: #{tpu_custom_call.1} parent=5 // pred_check
        %p2291 = pneg %p2290
      $region162: #{tpu_custom_call.1} parent=5 // pred_check_branch
        %2293 = sbr.rel (%p2291) target = $region164
      $region163: #{tpu_custom_call.1} parent=5 // pred_region
        %s2294 = ssub.s32 %s37, 2
        // Predicated region
        $region165: #{tpu_custom_call.1} parent=163 // pred_check
          %p2295 = pneg %p428
        $region166: #{tpu_custom_call.1} parent=163 // pred_check_branch
          %2297 = sbr.rel (%p2295) target = $region168
        $region167: #{tpu_custom_call.1} parent=163 // pred_region
          %s2298 = sand.u32 %s413, 1
          %s2299 = scalar_lea.sflag [#allocation4], %s2298
          %s2300 = sand.u32 %s413, 1
          %s2301 = smul.addr %s2300, 1280
          %s2302 = scalar_lea.vmem [#allocation29], %s2301
          %2304 = dma.done %s2299, 20480
        $region168: #{tpu_custom_call.1} parent=163 // pred_fallthru
          _
      $region164: #{tpu_custom_call.1} parent=5 // pred_fallthru
        _
    $region6: #{tpu_custom_call.1} parent=1 // loop_footer
      %s41 = sadd.s32 1, %s37
    $region7: #{tpu_custom_call.1} parent=1 // loop_footer_branch
      %36 = sbr.rel target = $region3
    $region8: #{tpu_custom_call.1} parent=1 // loop_exit
      _
    %2305 = vsyncpa [#allocation3], 1
    %s2306 = scalar_lea.sflag [#allocation3], 1
    %2307 = vsyncpa %s2306, 1
    %2308 = vsyncpa [#allocation6], 1
    %2309 = vsyncpa [#allocation9], 1
    %2310 = vsyncpa [#allocation12], 1
    %2311 = vsyncpa [#allocation15], 1
    %2312 = vsyncpa [#allocation18], 1
    %2313 = vsyncpa [#allocation21], 1
    %2314 = vsyncpa [#allocation24], 1
    %2315 = vsyncpa [#allocation27], 1
    %2316 = vsyncpa [#allocation4], 1
    %s2317 = scalar_lea.sflag [#allocation4], 1
    %2318 = vsyncpa %s2317, 1

</llo_original>
